<compile_context>
chip_gen: v6e
topology: v6e:2x2x1
jax: 0.10.0
libtpu: 0.0.40
codegen_flags: <defaults>
</compile_context>

<pallas_src>
import functools
import math

import jax
import jax.numpy as jnp
from jax import lax
from jax.experimental import pallas as pl
from jax.experimental.pallas import tpu as pltpu


# ------------------------------- kernel ------------------------------------


def _flash_group_kernel(q_ref, k_ref, v_ref, o_ref, *, scale, tk, n_kv, kv_len, gb,
                        max_kv_unroll=8):
    """One grid step = `gb` heads x one query tile, with full-length K/V resident in VMEM.

    q_ref : (gb, ch, tq)     packed-Q tile for this head block
    k_ref : (gb, ch, T_pad)  full-length K (fetched once per head block)
    v_ref : (gb, ch, T_pad)  full-length V (fetched once per head block)
    o_ref : (gb, ch, tq)     channels-first, lane-dense output tile
    """
    dtype = q_ref.dtype
    _, ch, tq = q_ref.shape

    for b in range(gb):  # static unroll over heads in the block (gb <= 8)
        # Fold the 1/sqrt(C) scale into Q (ch*tq elems, once per tile, not per kv step)
        # and pre-transpose Q once so both MXU feeds below are natively supported
        # (lhs contracts on its last dim; rhs may contract on either dim).
        q_t = jnp.transpose(q_ref[b].astype(jnp.float32) * scale).astype(dtype)  # (tq, ch)

        def kv_step(start, carry):
            m, l, acc = carry                                   # (tq,1),(tq,1),(tq,ch) f32
            k = k_ref[b, :, pl.ds(start, tk)]                   # (ch, tk)
            v = v_ref[b, :, pl.ds(start, tk)]                   # (ch, tk)
            # (tq,ch) x (ch,tk) -> (tq,tk): standard MXU feed, no per-step transpose.
            s = lax.dot_general(q_t, k, (((1,), (0,)), ((), ())),
                                preferred_element_type=jnp.float32)
            # Mask padded key columns (only emitted for chunks that can touch padding).
            if kv_len is not None and (not isinstance(start, int) or start + tk > kv_len):
                pos = start + lax.broadcasted_iota(jnp.int32, (1, tk), 1)
                s = jnp.where(pos < kv_len, s, -1e30)
            m_new = jnp.maximum(m, jnp.max(s, axis=-1, keepdims=True))
            alpha = jnp.exp(m - m_new)
            p = jnp.exp(s - m_new)                              # f32 exp (v5e-safe)
            l_new = alpha * l + jnp.sum(p, axis=-1, keepdims=True)
            # (tq,tk) x (ch,tk)^T -> (tq,ch): rhs contracted on its last dim
            # (native transpose-rhs MXU feed).
            pv = lax.dot_general(p.astype(dtype), v, (((1,), (1,)), ((), ())),
                                 preferred_element_type=jnp.float32)
            return m_new, l_new, alpha * acc + pv

        carry = (jnp.full((tq, 1), -jnp.inf, jnp.float32),
                 jnp.zeros((tq, 1), jnp.float32),
                 jnp.zeros((tq, ch), jnp.float32))
        if n_kv <= max_kv_unroll:
            for ki in range(n_kv):                 # static starts -> static lane slices
                carry = kv_step(ki * tk, carry)
        else:
            # TODO(synk): for very long sequences consider streaming K/V via a kv grid
            # axis instead of the dynamic lane-dim slice used here.
            carry = lax.fori_loop(
                0, n_kv, lambda ki, c: kv_step(pl.multiple_of(ki * tk, tk), c), carry)

        _, l, acc = carry
        out = acc * pl.reciprocal(l, approx=False)              # (tq, ch), once per tile
        o_ref[b] = jnp.transpose(out).astype(o_ref.dtype)       # (ch, tq) lane-dense store


# ------------------------------- wrapper ------------------------------------


def _round_up(x, m):
    return ((x + m - 1) // m) * m


def _pick_tile(total_128, target):
    """Largest multiple of 128 <= target that divides total_128 (a multiple of 128)."""
    t = max(128, min(total_128, (target // 128) * 128))
    while total_128 % t:
        t -= 128
    return t


def _pick_group(G, ch, t_pad, tq, tk, itemsize, max_heads, nq,
                budget_bytes=20 * 1024 * 1024):
    """Heads per grid step: largest divisor of G fitting a per-step VMEM budget."""
    per_head_io = (4 * ch * tq + 4 * ch * t_pad) * itemsize   # Q/O + K/V, double-buffered
    per_head_tmp = 3 * tq * tk * 4 + 2 * tq * ch * 4          # s/p temporaries + f32 acc
    per_head = per_head_io + per_head_tmp
    gb = 1
    for cand in range(min(max_heads, G), 0, -1):
        if G % cand == 0 and cand * per_head <= budget_bytes:
            gb = cand
            break
    # Keep at least 2 grid steps on the parallel axes when possible (v7x has 2 TCs).
    while gb > 1 and (G // gb) * nq < 2:
        cand = gb - 1
        while cand > 1 and G % cand:
            cand -= 1
        gb = cand
    return gb


def qkv_attention_legacy(qkv, n_heads, *, q_tile=512, kv_tile=1024, max_heads_per_step=8):
    """Pallas TPU equivalent of QKVAttentionLegacy.forward.

    qkv: [N, H*3*C, T]  ->  [N, H*C, T]
    """
    bs, width, length = qkv.shape
    assert width % (3 * n_heads) == 0
    ch = width // (3 * n_heads)
    G = bs * n_heads
    dtype = qkv.dtype
    itemsize = jnp.dtype(dtype).itemsize
    # q/k/v row offsets inside the packed (3C, T) slab must be sublane-tile aligned:
    # 8 for 4-byte dtypes, 16 for bf16, 32 for int8/fp8.
    sub = {4: 8, 2: 16, 1: 32}.get(itemsize, 8)

    ch_p = _round_up(ch, sub)
    t_p = _round_up(length, 128)
    scale = 1.0 / math.sqrt(ch)          # true head dim (matches scaled_dot_product_attention)

    x = qkv.reshape(G, 3 * ch, length)   # free reshape: no transpose, no up-cast
    padded = (ch_p != ch) or (t_p != length)
    if padded:
        x = x.reshape(G, 3, ch, length)
        x = jnp.pad(x, ((0, 0), (0, 0), (0, ch_p - ch), (0, t_p - length)))
        x = x.reshape(G, 3 * ch_p, t_p)

    tq = _pick_tile(t_p, q_tile)
    tk = _pick_tile(t_p, kv_tile)
    nq = t_p // tq
    n_kv = t_p // tk
    gb = _pick_group(G, ch_p, t_p, tq, tk, itemsize, max_heads_per_step, nq)

    kernel = functools.partial(
        _flash_group_kernel, scale=scale, tk=tk, n_kv=n_kv,
        kv_len=(length if t_p != length else None), gb=gb)

    out = pl.pallas_call(
        kernel,
        out_shape=jax.ShapeDtypeStruct((G, ch_p, t_p), dtype),
        grid=(G // gb, nq),  # query-tile axis innermost -> K/V block index constant over it
        in_specs=[
            pl.BlockSpec((gb, ch_p, tq), lambda g, qi: (g, 0, qi)),    # Q rows [0, C)
            pl.BlockSpec((gb, ch_p, t_p), lambda g, qi: (g, 1, 0)),    # K rows [C, 2C), full T
            pl.BlockSpec((gb, ch_p, t_p), lambda g, qi: (g, 2, 0)),    # V rows [2C, 3C), full T
        ],
        out_specs=pl.BlockSpec((gb, ch_p, tq), lambda g, qi: (g, 0, qi)),
        compiler_params=pltpu.CompilerParams(
            dimension_semantics=("parallel", "parallel"),
            vmem_limit_bytes=32 * 1024 * 1024),
    )(x, x, x)

    if padded:
        out = out[:, :ch, :length]
    return out.reshape(bs, n_heads * ch, length)


# ----------------------------- pure-JAX reference ----------------------------


def qkv_attention_legacy_ref(qkv, n_heads):
    bs, width, length = qkv.shape
    ch = width // (3 * n_heads)
    x = qkv.astype(jnp.float32).reshape(bs * n_heads, 3 * ch, length)
    q, k, v = x[:, :ch], x[:, ch:2 * ch], x[:, 2 * ch:]
    s = jnp.einsum("gct,gcs->gts", q, k) / math.sqrt(ch)
    p = jax.nn.softmax(s, axis=-1)
    a = jnp.einsum("gts,gcs->gct", p, v)                       # (G, C, T)
    return a.reshape(bs, n_heads * ch, length)


if __name__ == "__main__":
    # Case 1: small f32 with unaligned T (exercises T padding + key masking).
    bs, n_heads, ch, T = 2, 2, 32, 16
    qkv = jax.random.normal(jax.random.PRNGKey(0), (bs, n_heads * 3 * ch, T), jnp.float32)
    fwd = jax.jit(functools.partial(qkv_attention_legacy, n_heads=n_heads))
    out = fwd(qkv)
    jax.block_until_ready(out)
    ref = qkv_attention_legacy_ref(qkv, n_heads)
    assert out.shape == (bs, n_heads * ch, T), out.shape
    assert bool(jnp.all(jnp.isfinite(out)))
    assert bool(jnp.allclose(out, ref, atol=2e-2, rtol=2e-2)), \
        float(jnp.max(jnp.abs(out - ref)))

    # Case 2: bf16, lane-aligned T (multi-head blocks per grid step, lane-dense stores).
    bs2, n_heads2, ch2, T2 = 2, 2, 64, 256
    qkv2_f32 = jax.random.normal(jax.random.PRNGKey(1),
                                 (bs2, n_heads2 * 3 * ch2, T2), jnp.float32)
    qkv2 = qkv2_f32.astype(jnp.bfloat16)
    out2 = jax.jit(functools.partial(qkv_attention_legacy, n_heads=n_heads2))(qkv2)
    jax.block_until_ready(out2)
    ref2 = qkv_attention_legacy_ref(qkv2, n_heads2)
    assert out2.shape == (bs2, n_heads2 * ch2, T2), out2.shape
    assert bool(jnp.all(jnp.isfinite(out2.astype(jnp.float32))))
    assert bool(jnp.allclose(out2.astype(jnp.float32), ref2, atol=5e-2, rtol=5e-2)), \
        float(jnp.max(jnp.abs(out2.astype(jnp.float32) - ref2)))

    print("KERNEL_OK")
</pallas_src>

<mosaic_0001>
module attributes {stable_mosaic.version = 11 : i64} {
  func.func @_flash_group_kernel(%arg0: i32, %arg1: i32, %arg2: memref<2x32x128xf32, #tpu.memory_space<vmem>>, %arg3: memref<2x32x128xf32, #tpu.memory_space<vmem>>, %arg4: memref<2x32x128xf32, #tpu.memory_space<vmem>>, %arg5: memref<2x32x128xf32, #tpu.memory_space<vmem>>) attributes {dimension_semantics = [#tpu.dimension_semantics<parallel>, #tpu.dimension_semantics<parallel>], iteration_bounds = array<i64: 2, 1>, scalar_prefetch = 0 : i64, scratch_operands = 0 : i64, tpu.core_type = #tpu.core_type<tc>, window_params = [{transform_indices = @transform_0, window_bounds = array<i64: 2, 32, 128>}, {transform_indices = @transform_1, window_bounds = array<i64: 2, 32, 128>}, {transform_indices = @transform_2, window_bounds = array<i64: 2, 32, 128>}, {transform_indices = @transform_3, window_bounds = array<i64: 2, 32, 128>}]} {
    %c0 = arith.constant 0 : index
    %c0_0 = arith.constant 0 : index
    %c0_1 = arith.constant 0 : index
    %0 = vector.load %arg2[%c0, %c0_0, %c0_1] : memref<2x32x128xf32, #tpu.memory_space<vmem>>, vector<1x32x128xf32>
    %1 = vector.shape_cast %0 : vector<1x32x128xf32> to vector<32x128xf32>
    %cst = arith.constant 0.176776692 : f32
    %2 = vector.broadcast %cst : f32 to vector<32x128xf32>
    %3 = arith.mulf %1, %2 : vector<32x128xf32>
    %4 = tpu.transpose %3, [1, 0] : vector<32x128xf32> -> vector<128x32xf32>
    %cst_2 = arith.constant 0xFF800000 : f32
    %5 = vector.broadcast %cst_2 : f32 to vector<128x1xf32>
    %cst_3 = arith.constant 0.000000e+00 : f32
    %6 = vector.broadcast %cst_3 : f32 to vector<128x1xf32>
    %cst_4 = arith.constant 0.000000e+00 : f32
    %7 = vector.broadcast %cst_4 : f32 to vector<128x32xf32>
    %c0_5 = arith.constant 0 : index
    %c0_6 = arith.constant 0 : index
    %c0_7 = arith.constant 0 : index
    %8 = vector.load %arg3[%c0_5, %c0_6, %c0_7] : memref<2x32x128xf32, #tpu.memory_space<vmem>>, vector<1x32x128xf32>
    %9 = vector.shape_cast %8 : vector<1x32x128xf32> to vector<32x128xf32>
    %c0_8 = arith.constant 0 : index
    %c0_9 = arith.constant 0 : index
    %c0_10 = arith.constant 0 : index
    %10 = vector.load %arg4[%c0_8, %c0_9, %c0_10] : memref<2x32x128xf32, #tpu.memory_space<vmem>>, vector<1x32x128xf32>
    %11 = vector.shape_cast %10 : vector<1x32x128xf32> to vector<32x128xf32>
    %cst_11 = arith.constant dense<0.000000e+00> : vector<128x128xf32>
    %12 = tpu.matmul %4, %9, %cst_11 {dimension_numbers = #tpu.dot_dimension_numbers<[1], [0], [0], [1], [0, 0, 1, 1], [], []>} : vector<128x32xf32>, vector<32x128xf32>, vector<128x128xf32> -> vector<128x128xf32>
    %13 = tpu.iota {dimensions = array<i32: 1>} : vector<1x128xi32>
    %c0_i32 = arith.constant 0 : i32
    %14 = vector.broadcast %c0_i32 : i32 to vector<1x128xi32>
    %15 = arith.addi %14, %13 : vector<1x128xi32>
    %c16_i32 = arith.constant 16 : i32
    %16 = vector.broadcast %c16_i32 : i32 to vector<1x128xi32>
    %17 = arith.cmpi slt, %15, %16 : vector<1x128xi32>
    %cst_12 = arith.constant -1.000000e+30 : f32
    %18 = vector.shape_cast %17 : vector<1x128xi1> to vector<1x128xi1>
    %19 = vector.broadcast %18 : vector<1x128xi1> to vector<128x128xi1>
    %20 = vector.broadcast %cst_12 : f32 to vector<128x128xf32>
    %21 = arith.select %19, %12, %20 : vector<128x128xi1>, vector<128x128xf32>
    %cst_13 = arith.constant dense<0xFF800000> : vector<128xf32>
    %22 = vector.multi_reduction <maximumf>, %21, %cst_13 [1] : vector<128x128xf32> to vector<128xf32>
    %23 = vector.shape_cast %22 : vector<128xf32> to vector<128x1xf32>
    %24 = arith.maximumf %5, %23 : vector<128x1xf32>
    %25 = arith.subf %5, %24 : vector<128x1xf32>
    %26 = math.exp %25 : vector<128x1xf32>
    %27 = vector.broadcast %24 : vector<128x1xf32> to vector<128x128xf32>
    %28 = arith.subf %21, %27 : vector<128x128xf32>
    %29 = math.exp %28 : vector<128x128xf32>
    %30 = arith.mulf %26, %6 : vector<128x1xf32>
    %cst_14 = arith.constant dense<0.000000e+00> : vector<128xf32>
    %31 = vector.multi_reduction <add>, %29, %cst_14 [1] : vector<128x128xf32> to vector<128xf32>
    %32 = vector.shape_cast %31 : vector<128xf32> to vector<128x1xf32>
    %33 = arith.addf %30, %32 : vector<128x1xf32>
    %cst_15 = arith.constant dense<0.000000e+00> : vector<128x32xf32>
    %34 = tpu.matmul %29, %11, %cst_15 {dimension_numbers = #tpu.dot_dimension_numbers<[1], [1], [0], [0], [0, 0, 1, 0], [], []>} : vector<128x128xf32>, vector<32x128xf32>, vector<128x32xf32> -> vector<128x32xf32>
    %35 = vector.broadcast %26 : vector<128x1xf32> to vector<128x32xf32>
    %36 = arith.mulf %35, %7 : vector<128x32xf32>
    %37 = arith.addf %36, %34 : vector<128x32xf32>
    %38 = tpu.reciprocal %33 : vector<128x1xf32> -> vector<128x1xf32>
    %39 = vector.broadcast %38 : vector<128x1xf32> to vector<128x32xf32>
    %40 = arith.mulf %37, %39 : vector<128x32xf32>
    %41 = tpu.transpose %40, [1, 0] : vector<128x32xf32> -> vector<32x128xf32>
    %c0_16 = arith.constant 0 : index
    %c0_17 = arith.constant 0 : index
    %c0_18 = arith.constant 0 : index
    %42 = vector.load %arg5[%c0_16, %c0_17, %c0_18] : memref<2x32x128xf32, #tpu.memory_space<vmem>>, vector<1x32x128xf32>
    %43 = vector.shape_cast %42 : vector<1x32x128xf32> to vector<32x128xf32>
    %44 = vector.shape_cast %41 : vector<32x128xf32> to vector<1x32x128xf32>
    tpu.vector_store %arg5[%c0_16, %c0_17, %c0_18], %44 {strides = array<i32>} : memref<2x32x128xf32, #tpu.memory_space<vmem>>, vector<1x32x128xf32>,
    %c1 = arith.constant 1 : index
    %c0_19 = arith.constant 0 : index
    %c0_20 = arith.constant 0 : index
    %45 = vector.load %arg2[%c1, %c0_19, %c0_20] : memref<2x32x128xf32, #tpu.memory_space<vmem>>, vector<1x32x128xf32>
    %46 = vector.shape_cast %45 : vector<1x32x128xf32> to vector<32x128xf32>
    %cst_21 = arith.constant 0.176776692 : f32
    %47 = vector.broadcast %cst_21 : f32 to vector<32x128xf32>
    %48 = arith.mulf %46, %47 : vector<32x128xf32>
    %49 = tpu.transpose %48, [1, 0] : vector<32x128xf32> -> vector<128x32xf32>
    %cst_22 = arith.constant 0xFF800000 : f32
    %50 = vector.broadcast %cst_22 : f32 to vector<128x1xf32>
    %cst_23 = arith.constant 0.000000e+00 : f32
    %51 = vector.broadcast %cst_23 : f32 to vector<128x1xf32>
    %cst_24 = arith.constant 0.000000e+00 : f32
    %52 = vector.broadcast %cst_24 : f32 to vector<128x32xf32>
    %c1_25 = arith.constant 1 : index
    %c0_26 = arith.constant 0 : index
    %c0_27 = arith.constant 0 : index
    %53 = vector.load %arg3[%c1_25, %c0_26, %c0_27] : memref<2x32x128xf32, #tpu.memory_space<vmem>>, vector<1x32x128xf32>
    %54 = vector.shape_cast %53 : vector<1x32x128xf32> to vector<32x128xf32>
    %c1_28 = arith.constant 1 : index
    %c0_29 = arith.constant 0 : index
    %c0_30 = arith.constant 0 : index
    %55 = vector.load %arg4[%c1_28, %c0_29, %c0_30] : memref<2x32x128xf32, #tpu.memory_space<vmem>>, vector<1x32x128xf32>
    %56 = vector.shape_cast %55 : vector<1x32x128xf32> to vector<32x128xf32>
    %cst_31 = arith.constant dense<0.000000e+00> : vector<128x128xf32>
    %57 = tpu.matmul %49, %54, %cst_31 {dimension_numbers = #tpu.dot_dimension_numbers<[1], [0], [0], [1], [0, 0, 1, 1], [], []>} : vector<128x32xf32>, vector<32x128xf32>, vector<128x128xf32> -> vector<128x128xf32>
    %58 = tpu.iota {dimensions = array<i32: 1>} : vector<1x128xi32>
    %c0_i32_32 = arith.constant 0 : i32
    %59 = vector.broadcast %c0_i32_32 : i32 to vector<1x128xi32>
    %60 = arith.addi %59, %58 : vector<1x128xi32>
    %c16_i32_33 = arith.constant 16 : i32
    %61 = vector.broadcast %c16_i32_33 : i32 to vector<1x128xi32>
    %62 = arith.cmpi slt, %60, %61 : vector<1x128xi32>
    %cst_34 = arith.constant -1.000000e+30 : f32
    %63 = vector.shape_cast %62 : vector<1x128xi1> to vector<1x128xi1>
    %64 = vector.broadcast %63 : vector<1x128xi1> to vector<128x128xi1>
    %65 = vector.broadcast %cst_34 : f32 to vector<128x128xf32>
    %66 = arith.select %64, %57, %65 : vector<128x128xi1>, vector<128x128xf32>
    %cst_35 = arith.constant dense<0xFF800000> : vector<128xf32>
    %67 = vector.multi_reduction <maximumf>, %66, %cst_35 [1] : vector<128x128xf32> to vector<128xf32>
    %68 = vector.shape_cast %67 : vector<128xf32> to vector<128x1xf32>
    %69 = arith.maximumf %50, %68 : vector<128x1xf32>
    %70 = arith.subf %50, %69 : vector<128x1xf32>
    %71 = math.exp %70 : vector<128x1xf32>
    %72 = vector.broadcast %69 : vector<128x1xf32> to vector<128x128xf32>
    %73 = arith.subf %66, %72 : vector<128x128xf32>
    %74 = math.exp %73 : vector<128x128xf32>
    %75 = arith.mulf %71, %51 : vector<128x1xf32>
    %cst_36 = arith.constant dense<0.000000e+00> : vector<128xf32>
    %76 = vector.multi_reduction <add>, %74, %cst_36 [1] : vector<128x128xf32> to vector<128xf32>
    %77 = vector.shape_cast %76 : vector<128xf32> to vector<128x1xf32>
    %78 = arith.addf %75, %77 : vector<128x1xf32>
    %cst_37 = arith.constant dense<0.000000e+00> : vector<128x32xf32>
    %79 = tpu.matmul %74, %56, %cst_37 {dimension_numbers = #tpu.dot_dimension_numbers<[1], [1], [0], [0], [0, 0, 1, 0], [], []>} : vector<128x128xf32>, vector<32x128xf32>, vector<128x32xf32> -> vector<128x32xf32>
    %80 = vector.broadcast %71 : vector<128x1xf32> to vector<128x32xf32>
    %81 = arith.mulf %80, %52 : vector<128x32xf32>
    %82 = arith.addf %81, %79 : vector<128x32xf32>
    %83 = tpu.reciprocal %78 : vector<128x1xf32> -> vector<128x1xf32>
    %84 = vector.broadcast %83 : vector<128x1xf32> to vector<128x32xf32>
    %85 = arith.mulf %82, %84 : vector<128x32xf32>
    %86 = tpu.transpose %85, [1, 0] : vector<128x32xf32> -> vector<32x128xf32>
    %c1_38 = arith.constant 1 : index
    %c0_39 = arith.constant 0 : index
    %c0_40 = arith.constant 0 : index
    %87 = vector.load %arg5[%c1_38, %c0_39, %c0_40] : memref<2x32x128xf32, #tpu.memory_space<vmem>>, vector<1x32x128xf32>
    %88 = vector.shape_cast %87 : vector<1x32x128xf32> to vector<32x128xf32>
    %89 = vector.shape_cast %86 : vector<32x128xf32> to vector<1x32x128xf32>
    tpu.vector_store %arg5[%c1_38, %c0_39, %c0_40], %89 {strides = array<i32>} : memref<2x32x128xf32, #tpu.memory_space<vmem>>, vector<1x32x128xf32>,
    return
  }
  func.func @transform_0(%arg0: i32, %arg1: i32) -> (i32, i32, i32) {
    %c0_i32 = arith.constant 0 : i32
    %c0_i32_0 = arith.constant 0 : i32
    return %arg0, %c0_i32, %arg1 : i32, i32, i32
  }
  func.func @transform_1(%arg0: i32, %arg1: i32) -> (i32, i32, i32) {
    %c1_i32 = arith.constant 1 : i32
    %c0_i32 = arith.constant 0 : i32
    %c0_i32_0 = arith.constant 0 : i32
    return %arg0, %c1_i32, %c0_i32 : i32, i32, i32
  }
  func.func @transform_2(%arg0: i32, %arg1: i32) -> (i32, i32, i32) {
    %c2_i32 = arith.constant 2 : i32
    %c0_i32 = arith.constant 0 : i32
    %c0_i32_0 = arith.constant 0 : i32
    return %arg0, %c2_i32, %c0_i32 : i32, i32, i32
  }
  func.func @transform_3(%arg0: i32, %arg1: i32) -> (i32, i32, i32) {
    %c0_i32 = arith.constant 0 : i32
    %c0_i32_0 = arith.constant 0 : i32
    return %arg0, %c0_i32, %arg1 : i32, i32, i32
  }
}

</mosaic_0001>

<llo_original>
// kernel: qkv_attention_legacy.1
$region0: #{qkv_attention_legacy.1}
  #allocation0 [shape = 'u32[]', space=smem, size = 0x4, offset = 0x4, fixed_abs, tag = 'smem constant byte address 0x4 - core index']
  #allocation1 [shape = 'u32[144,128]{1,0:T(1,128)}', space=vmem, size = 0x12000, scoped, tag = 'internal scratch']
  %s0 = inlined_call_operand.vmem [shape: f32[4,96,128], index: 0, kind: input, shape index: {}, may-alias: {0,1,2}]
  %s1 = inlined_call_operand.vmem [shape: f32[4,96,128], index: 1, kind: input, shape index: {}, may-alias: {0,1,2}]
  %s2 = inlined_call_operand.vmem [shape: f32[4,96,128], index: 2, kind: input, shape index: {}, may-alias: {0,1,2}]
  %s3 = inlined_call_operand.vmem [shape: f32[4,32,128], index: 3, kind: output, shape index: {}]
  %s4 = sld [smem:[#allocation0]]
  $region159: #{qkv_attention_legacy.1} parent=0
    _
  %s6 = ssub.s32 1, %s4
  %s7 = scalar_select 0, %s6, %s4
  $region1: #{qkv_attention_legacy.1} parent=0
    #allocation2 [shape = 'u8[65536]{0}', space=vmem, size = 0x10000, scoped, tag = 'input window, operand 0']
    #allocation3 [shape = 'u8[65536]{0}', space=vmem, size = 0x10000, scoped, tag = 'input window, operand 1']
    #allocation4 [shape = 'u8[65536]{0}', space=vmem, size = 0x10000, scoped, tag = 'input window, operand 2']
    loop: start=0, step=1, limit=4
    $region2: #{qkv_attention_legacy.1} parent=1 // loop_pre_header
      _
    $region3: #{qkv_attention_legacy.1} parent=1 // loop_header
      %s9 = sphi 0, %s13
      %p10 = scmp.ge.s32.totalorder %s9, 4
      %s16 = sphi 0, %s28
      %s17 = sphi 0, %s24
      %s18 = sphi 0, %s16
      %s19 = sphi 0, %s17
      %s20 = sphi 0, %s18
      %s21 = sphi 0, %s19
      %s33 = sphi 0, %s35
      %s36 = sphi 0, %s33
      %s37 = sphi 0, %s36
      %s53 = sphi 0, %s37
      %s59 = sphi 0, %s61
      %s62 = sphi 0, %s59
      %s63 = sphi 0, %s62
      %s79 = sphi 0, %s63
      %s85 = sphi 0, %s87
      %s88 = sphi 0, %s85
      %s89 = sphi 0, %s88
      %s105 = sphi 0, %s89
      %s113 = sphi 0, %s115
      %s116 = sphi 0, %s113
      %s117 = sphi 0, %s116
      %s133 = sphi 0, %s117
    $region4: #{qkv_attention_legacy.1} parent=1 // loop_header_branch
      %12 = sbr.rel (%p10) target = $region8
    $region5: #{qkv_attention_legacy.1} parent=1 // loop_body
      %s14 = ssub.s32 %s9, 1
      %s15 = ssub.s32 %s9, 2
      %s22 = sadd.s32 1, %s17
      %p23 = scmp.ge.s32.totalorder %s22, 1
      %s24 = scalar_select %p23, 0, %s22
      %s25 = sadd.s32 1, %s16
      %s26 = scalar_select %p23, %s25, %s16
      %p27 = scmp.ge.s32.totalorder %s26, 2
      %s28 = scalar_select %p27, 0, %s26
      %s29 = ssub.s32 %s16, %s28
      %s30 = ssub.s32 %s17, %s24
      %s31 = sor.u32 %s29, %s30
      %p32 = scmp.eq.s32.totalorder %s31, 0
      %s34 = sadd.s32 %s33, 1
      %s35 = scalar_select %p32, %s33, %s34
      %p38 = pneg %p32
      %p39 = scmp.eq.s32.totalorder %s9, 1
      %p40 = por %p38, %p39
      %p41 = scmp.ne.s32.totalorder %s33, %s36
      %p42 = scmp.eq.s32.totalorder %s9, 0
      %p43 = por %p41, %p42
      %p44 = scmp.ne.s32.totalorder %s33, %s36
      %p45 = scmp.eq.s32.totalorder %s14, 1
      %p46 = por %p44, %p45
      %p47 = scmp.ne.s32.totalorder %s36, %s37
      %p48 = scmp.eq.s32.totalorder %s14, 0
      %p49 = por %p47, %p48
      %p50 = scmp.ne.s32.totalorder %s36, %s37
      %p51 = scmp.eq.s32.totalorder %s15, 1
      %p52 = por %p50, %p51
      %p54 = scmp.ne.s32.totalorder %s37, %s53
      %p55 = scmp.eq.s32.totalorder %s15, 0
      %p56 = por %p54, %p55
      %s57 = ssub.s32 %s16, %s28
      %p58 = scmp.eq.s32.totalorder %s57, 0
      %s60 = sadd.s32 %s59, 1
      %s61 = scalar_select %p58, %s59, %s60
      %p64 = pneg %p58
      %p65 = scmp.eq.s32.totalorder %s9, 1
      %p66 = por %p64, %p65
      %p67 = scmp.ne.s32.totalorder %s59, %s62
      %p68 = scmp.eq.s32.totalorder %s9, 0
      %p69 = por %p67, %p68
      %p70 = scmp.ne.s32.totalorder %s59, %s62
      %p71 = scmp.eq.s32.totalorder %s14, 1
      %p72 = por %p70, %p71
      %p73 = scmp.ne.s32.totalorder %s62, %s63
      %p74 = scmp.eq.s32.totalorder %s14, 0
      %p75 = por %p73, %p74
      %p76 = scmp.ne.s32.totalorder %s62, %s63
      %p77 = scmp.eq.s32.totalorder %s15, 1
      %p78 = por %p76, %p77
      %p80 = scmp.ne.s32.totalorder %s63, %s79
      %p81 = scmp.eq.s32.totalorder %s15, 0
      %p82 = por %p80, %p81
      %s83 = ssub.s32 %s16, %s28
      %p84 = scmp.eq.s32.totalorder %s83, 0
      %s86 = sadd.s32 %s85, 1
      %s87 = scalar_select %p84, %s85, %s86
      %p90 = pneg %p84
      %p91 = scmp.eq.s32.totalorder %s9, 1
      %p92 = por %p90, %p91
      %p93 = scmp.ne.s32.totalorder %s85, %s88
      %p94 = scmp.eq.s32.totalorder %s9, 0
      %p95 = por %p93, %p94
      %p96 = scmp.ne.s32.totalorder %s85, %s88
      %p97 = scmp.eq.s32.totalorder %s14, 1
      %p98 = por %p96, %p97
      %p99 = scmp.ne.s32.totalorder %s88, %s89
      %p100 = scmp.eq.s32.totalorder %s14, 0
      %p101 = por %p99, %p100
      %p102 = scmp.ne.s32.totalorder %s88, %s89
      %p103 = scmp.eq.s32.totalorder %s15, 1
      %p104 = por %p102, %p103
      %p106 = scmp.ne.s32.totalorder %s89, %s105
      %p107 = scmp.eq.s32.totalorder %s15, 0
      %p108 = por %p106, %p107
      %s109 = ssub.s32 %s16, %s28
      %s110 = ssub.s32 %s17, %s24
      %s111 = sor.u32 %s109, %s110
      %p112 = scmp.eq.s32.totalorder %s111, 0
      %s114 = sadd.s32 %s113, 1
      %s115 = scalar_select %p112, %s113, %s114
      %p118 = pneg %p112
      %p119 = scmp.eq.s32.totalorder %s9, 1
      %p120 = por %p118, %p119
      %p121 = scmp.ne.s32.totalorder %s113, %s116
      %p122 = scmp.eq.s32.totalorder %s9, 0
      %p123 = por %p121, %p122
      %p124 = scmp.ne.s32.totalorder %s113, %s116
      %p125 = scmp.eq.s32.totalorder %s14, 1
      %p126 = por %p124, %p125
      %p127 = scmp.ne.s32.totalorder %s116, %s117
      %p128 = scmp.eq.s32.totalorder %s14, 0
      %p129 = por %p127, %p128
      %p130 = scmp.ne.s32.totalorder %s116, %s117
      %p131 = scmp.eq.s32.totalorder %s15, 1
      %p132 = por %p130, %p131
      %p134 = scmp.ne.s32.totalorder %s117, %s133
      %p135 = scmp.eq.s32.totalorder %s15, 0
      %p136 = por %p134, %p135
      %p137 = scmp.le.s32.totalorder 1, %s9
      %p138 = scmp.lt.s32.totalorder %s9, 3
      %p139 = pnand %p137, %p138
      %p140 = pneg %p139
      // Predicated region
      $region9: #{qkv_attention_legacy.1} parent=5 // pred_check
        _
      $region10: #{qkv_attention_legacy.1} parent=5 // pred_check_branch
        %142 = sbr.rel (%p139) target = $region12
      $region11: #{qkv_attention_legacy.1} parent=5 // pred_region
        %s143 = ssub.s32 %s9, 1
      $region12: #{qkv_attention_legacy.1} parent=5 // pred_fallthru
        _
      %p144 = scmp.lt.s32.totalorder %s9, 2
      // Predicated region
      $region13: #{qkv_attention_legacy.1} parent=5 // pred_check
        %p145 = pneg %p144
      $region14: #{qkv_attention_legacy.1} parent=5 // pred_check_branch
        %147 = sbr.rel (%p145) target = $region16
      $region15: #{qkv_attention_legacy.1} parent=5 // pred_region
        // Predicated region
        $region17: #{qkv_attention_legacy.1} parent=15 // pred_check
          %p148 = pneg %p43
        $region18: #{qkv_attention_legacy.1} parent=15 // pred_check_branch
          %150 = sbr.rel (%p148) target = $region20
        $region19: #{qkv_attention_legacy.1} parent=15 // pred_region
          %s151 = sand.u32 %s33, 1
          %s152 = sand.u32 %s33, 1
          %s153 = smul.addr %s152, 64
          %s154 = scalar_lea.vmem [#allocation2], %s153
          %s155 = smul.u32 2, %s16
          %s156 = smul.addr %s155, 12
          %s157 = sadd.s32 %s17, %s156
          %s158 = smul.addr %s157, 8
          %s159 = scalar_lea.vmem %s0, %s158
          // Predicated region
          $region21: #{qkv_attention_legacy.1} parent=19 // pred_check
            _
          $region22: #{qkv_attention_legacy.1} parent=19 // pred_check_branch
            %161 = sbr.rel (0) target = $region24
          $region23: #{qkv_attention_legacy.1} parent=19 // pred_region
            // Predicated region
            $region25: #{qkv_attention_legacy.1} parent=23 // pred_check
              _
            $region26: #{qkv_attention_legacy.1} parent=23 // pred_check_branch
              %163 = sbr.rel (0) target = $region28
            $region27: #{qkv_attention_legacy.1} parent=23 // pred_region
              // Predicated region
              $region40: #{qkv_attention_legacy.1} parent=27 // pred_check
                _
              $region41: #{qkv_attention_legacy.1} parent=27 // pred_check_branch
                %193 = sbr.rel (0) target = $region43
              $region42: #{qkv_attention_legacy.1} parent=27 // pred_region
                loop: start=0, step=1, limit=1
                $region44: #{qkv_attention_legacy.1} parent=42 // loop_pre_header
                  _
                $region45: #{qkv_attention_legacy.1} parent=42 // loop_header
                  %s195 = sphi 0, %s199
                  %p196 = scmp.ge.s32.totalorder %s195, 1
                  %s200 = sphi %s159, %s159
                  %s201 = sphi %s154, %s154
                $region46: #{qkv_attention_legacy.1} parent=42 // loop_header_branch
                  %198 = sbr.rel (%p196) target = $region50
                $region47: #{qkv_attention_legacy.1} parent=42 // loop_body
                  %v202 = vld [vmem:[%s200] sm:$0xff]
                  %203 = vst [vmem:[%s201] sm:$0xff] %v202
                  %v204 = vld [vmem:[%s200 + $0x8] sm:$0xff]
                  %205 = vst [vmem:[%s201 + $0x8] sm:$0xff] %v204
                  %v206 = vld [vmem:[%s200 + $0x10] sm:$0xff]
                  %207 = vst [vmem:[%s201 + $0x10] sm:$0xff] %v206
                  %v208 = vld [vmem:[%s200 + $0x18] sm:$0xff]
                  %209 = vst [vmem:[%s201 + $0x18] sm:$0xff] %v208
                  %v210 = vld [vmem:[%s200 + $0x60] sm:$0xff]
                  %211 = vst [vmem:[%s201 + $0x20] sm:$0xff] %v210
                  %v212 = vld [vmem:[%s200 + $0x68] sm:$0xff]
                  %213 = vst [vmem:[%s201 + $0x28] sm:$0xff] %v212
                  %v214 = vld [vmem:[%s200 + $0x70] sm:$0xff]
                  %215 = vst [vmem:[%s201 + $0x30] sm:$0xff] %v214
                  %v216 = vld [vmem:[%s200 + $0x78] sm:$0xff]
                  %217 = vst [vmem:[%s201 + $0x38] sm:$0xff] %v216
                $region48: #{qkv_attention_legacy.1} parent=42 // loop_footer
                  %s199 = sadd.s32 1, %s195
                $region49: #{qkv_attention_legacy.1} parent=42 // loop_footer_branch
                  %194 = sbr.rel target = $region45
                $region50: #{qkv_attention_legacy.1} parent=42 // loop_exit
                  _
              $region43: #{qkv_attention_legacy.1} parent=27 // pred_fallthru
                _
              // Predicated region
              $region51: #{qkv_attention_legacy.1} parent=27 // pred_check
                _
              $region52: #{qkv_attention_legacy.1} parent=27 // pred_check_branch
                %219 = sbr.rel target = $region54
              $region53: #{qkv_attention_legacy.1} parent=27 // pred_region
                _
              $region54: #{qkv_attention_legacy.1} parent=27 // pred_fallthru
                _
            $region28: #{qkv_attention_legacy.1} parent=23 // pred_fallthru
              _
            // Predicated region
            $region29: #{qkv_attention_legacy.1} parent=23 // pred_check
              _
            $region30: #{qkv_attention_legacy.1} parent=23 // pred_check_branch
              %165 = sbr.rel target = $region32
            $region31: #{qkv_attention_legacy.1} parent=23 // pred_region
              %s167 = ssub.s32 256, 1
              loop: start=0, step=1, limit=1
              $region33: #{qkv_attention_legacy.1} parent=31 // loop_pre_header
                _
              $region34: #{qkv_attention_legacy.1} parent=31 // loop_header
                %s169 = sphi 0, %s173
                %p170 = scmp.ge.s32.totalorder %s169, 1
                %s174 = sphi %s159, %s159
                %s175 = sphi %s154, %s154
              $region35: #{qkv_attention_legacy.1} parent=31 // loop_header_branch
                %172 = sbr.rel (%p170) target = $region39
              $region36: #{qkv_attention_legacy.1} parent=31 // loop_body
                %v176 = vld [vmem:[%s174] sm:%s167]
                %177 = vst [vmem:[%s175] sm:%s167] %v176
                %v178 = vld [vmem:[%s174 + $0x8] sm:%s167]
                %179 = vst [vmem:[%s175 + $0x8] sm:%s167] %v178
                %v180 = vld [vmem:[%s174 + $0x10] sm:%s167]
                %181 = vst [vmem:[%s175 + $0x10] sm:%s167] %v180
                %v182 = vld [vmem:[%s174 + $0x18] sm:%s167]
                %183 = vst [vmem:[%s175 + $0x18] sm:%s167] %v182
                %v184 = vld [vmem:[%s174 + $0x60] sm:%s167]
                %185 = vst [vmem:[%s175 + $0x20] sm:%s167] %v184
                %v186 = vld [vmem:[%s174 + $0x68] sm:%s167]
                %187 = vst [vmem:[%s175 + $0x28] sm:%s167] %v186
                %v188 = vld [vmem:[%s174 + $0x70] sm:%s167]
                %189 = vst [vmem:[%s175 + $0x30] sm:%s167] %v188
                %v190 = vld [vmem:[%s174 + $0x78] sm:%s167]
                %191 = vst [vmem:[%s175 + $0x38] sm:%s167] %v190
              $region37: #{qkv_attention_legacy.1} parent=31 // loop_footer
                %s173 = sadd.s32 1, %s169
              $region38: #{qkv_attention_legacy.1} parent=31 // loop_footer_branch
                %168 = sbr.rel target = $region34
              $region39: #{qkv_attention_legacy.1} parent=31 // loop_exit
                _
            $region32: #{qkv_attention_legacy.1} parent=23 // pred_fallthru
              _
          $region24: #{qkv_attention_legacy.1} parent=19 // pred_fallthru
            _
          %220 = vnop
        $region20: #{qkv_attention_legacy.1} parent=15 // pred_fallthru
          _
        // Predicated region
        $region55: #{qkv_attention_legacy.1} parent=15 // pred_check
          %p221 = pneg %p69
        $region56: #{qkv_attention_legacy.1} parent=15 // pred_check_branch
          %223 = sbr.rel (%p221) target = $region58
        $region57: #{qkv_attention_legacy.1} parent=15 // pred_region
          %s224 = sand.u32 %s59, 1
          %s225 = sand.u32 %s59, 1
          %s226 = smul.addr %s225, 64
          %s227 = scalar_lea.vmem [#allocation3], %s226
          %s228 = smul.u32 2, %s16
          %s229 = smul.addr %s228, 12
          %s230 = sadd.s32 4, %s229
          %s231 = smul.addr %s230, 8
          %s232 = scalar_lea.vmem %s1, %s231
          // Predicated region
          $region59: #{qkv_attention_legacy.1} parent=57 // pred_check
            _
          $region60: #{qkv_attention_legacy.1} parent=57 // pred_check_branch
            %234 = sbr.rel (0) target = $region62
          $region61: #{qkv_attention_legacy.1} parent=57 // pred_region
            // Predicated region
            $region63: #{qkv_attention_legacy.1} parent=61 // pred_check
              _
            $region64: #{qkv_attention_legacy.1} parent=61 // pred_check_branch
              %236 = sbr.rel (0) target = $region66
            $region65: #{qkv_attention_legacy.1} parent=61 // pred_region
              // Predicated region
              $region78: #{qkv_attention_legacy.1} parent=65 // pred_check
                _
              $region79: #{qkv_attention_legacy.1} parent=65 // pred_check_branch
                %266 = sbr.rel (0) target = $region81
              $region80: #{qkv_attention_legacy.1} parent=65 // pred_region
                loop: start=0, step=1, limit=1
                $region82: #{qkv_attention_legacy.1} parent=80 // loop_pre_header
                  _
                $region83: #{qkv_attention_legacy.1} parent=80 // loop_header
                  %s268 = sphi 0, %s272
                  %p269 = scmp.ge.s32.totalorder %s268, 1
                  %s273 = sphi %s232, %s232
                  %s274 = sphi %s227, %s227
                $region84: #{qkv_attention_legacy.1} parent=80 // loop_header_branch
                  %271 = sbr.rel (%p269) target = $region88
                $region85: #{qkv_attention_legacy.1} parent=80 // loop_body
                  %v275 = vld [vmem:[%s273] sm:$0xff]
                  %276 = vst [vmem:[%s274] sm:$0xff] %v275
                  %v277 = vld [vmem:[%s273 + $0x8] sm:$0xff]
                  %278 = vst [vmem:[%s274 + $0x8] sm:$0xff] %v277
                  %v279 = vld [vmem:[%s273 + $0x10] sm:$0xff]
                  %280 = vst [vmem:[%s274 + $0x10] sm:$0xff] %v279
                  %v281 = vld [vmem:[%s273 + $0x18] sm:$0xff]
                  %282 = vst [vmem:[%s274 + $0x18] sm:$0xff] %v281
                  %v283 = vld [vmem:[%s273 + $0x60] sm:$0xff]
                  %284 = vst [vmem:[%s274 + $0x20] sm:$0xff] %v283
                  %v285 = vld [vmem:[%s273 + $0x68] sm:$0xff]
                  %286 = vst [vmem:[%s274 + $0x28] sm:$0xff] %v285
                  %v287 = vld [vmem:[%s273 + $0x70] sm:$0xff]
                  %288 = vst [vmem:[%s274 + $0x30] sm:$0xff] %v287
                  %v289 = vld [vmem:[%s273 + $0x78] sm:$0xff]
                  %290 = vst [vmem:[%s274 + $0x38] sm:$0xff] %v289
                $region86: #{qkv_attention_legacy.1} parent=80 // loop_footer
                  %s272 = sadd.s32 1, %s268
                $region87: #{qkv_attention_legacy.1} parent=80 // loop_footer_branch
                  %267 = sbr.rel target = $region83
                $region88: #{qkv_attention_legacy.1} parent=80 // loop_exit
                  _
              $region81: #{qkv_attention_legacy.1} parent=65 // pred_fallthru
                _
              // Predicated region
              $region89: #{qkv_attention_legacy.1} parent=65 // pred_check
                _
              $region90: #{qkv_attention_legacy.1} parent=65 // pred_check_branch
                %292 = sbr.rel target = $region92
              $region91: #{qkv_attention_legacy.1} parent=65 // pred_region
                _
              $region92: #{qkv_attention_legacy.1} parent=65 // pred_fallthru
                _
            $region66: #{qkv_attention_legacy.1} parent=61 // pred_fallthru
              _
            // Predicated region
            $region67: #{qkv_attention_legacy.1} parent=61 // pred_check
              _
            $region68: #{qkv_attention_legacy.1} parent=61 // pred_check_branch
              %238 = sbr.rel target = $region70
            $region69: #{qkv_attention_legacy.1} parent=61 // pred_region
              %s240 = ssub.s32 256, 1
              loop: start=0, step=1, limit=1
              $region71: #{qkv_attention_legacy.1} parent=69 // loop_pre_header
                _
              $region72: #{qkv_attention_legacy.1} parent=69 // loop_header
                %s242 = sphi 0, %s246
                %p243 = scmp.ge.s32.totalorder %s242, 1
                %s247 = sphi %s232, %s232
                %s248 = sphi %s227, %s227
              $region73: #{qkv_attention_legacy.1} parent=69 // loop_header_branch
                %245 = sbr.rel (%p243) target = $region77
              $region74: #{qkv_attention_legacy.1} parent=69 // loop_body
                %v249 = vld [vmem:[%s247] sm:%s240]
                %250 = vst [vmem:[%s248] sm:%s240] %v249
                %v251 = vld [vmem:[%s247 + $0x8] sm:%s240]
                %252 = vst [vmem:[%s248 + $0x8] sm:%s240] %v251
                %v253 = vld [vmem:[%s247 + $0x10] sm:%s240]
                %254 = vst [vmem:[%s248 + $0x10] sm:%s240] %v253
                %v255 = vld [vmem:[%s247 + $0x18] sm:%s240]
                %256 = vst [vmem:[%s248 + $0x18] sm:%s240] %v255
                %v257 = vld [vmem:[%s247 + $0x60] sm:%s240]
                %258 = vst [vmem:[%s248 + $0x20] sm:%s240] %v257
                %v259 = vld [vmem:[%s247 + $0x68] sm:%s240]
                %260 = vst [vmem:[%s248 + $0x28] sm:%s240] %v259
                %v261 = vld [vmem:[%s247 + $0x70] sm:%s240]
                %262 = vst [vmem:[%s248 + $0x30] sm:%s240] %v261
                %v263 = vld [vmem:[%s247 + $0x78] sm:%s240]
                %264 = vst [vmem:[%s248 + $0x38] sm:%s240] %v263
              $region75: #{qkv_attention_legacy.1} parent=69 // loop_footer
                %s246 = sadd.s32 1, %s242
              $region76: #{qkv_attention_legacy.1} parent=69 // loop_footer_branch
                %241 = sbr.rel target = $region72
              $region77: #{qkv_attention_legacy.1} parent=69 // loop_exit
                _
            $region70: #{qkv_attention_legacy.1} parent=61 // pred_fallthru
              _
          $region62: #{qkv_attention_legacy.1} parent=57 // pred_fallthru
            _
          %293 = vnop
        $region58: #{qkv_attention_legacy.1} parent=15 // pred_fallthru
          _
        // Predicated region
        $region93: #{qkv_attention_legacy.1} parent=15 // pred_check
          %p294 = pneg %p95
        $region94: #{qkv_attention_legacy.1} parent=15 // pred_check_branch
          %296 = sbr.rel (%p294) target = $region96
        $region95: #{qkv_attention_legacy.1} parent=15 // pred_region
          %s297 = sand.u32 %s85, 1
          %s298 = sand.u32 %s85, 1
          %s299 = smul.addr %s298, 64
          %s300 = scalar_lea.vmem [#allocation4], %s299
          %s301 = smul.u32 2, %s16
          %s302 = smul.addr %s301, 12
          %s303 = sadd.s32 8, %s302
          %s304 = smul.addr %s303, 8
          %s305 = scalar_lea.vmem %s2, %s304
          // Predicated region
          $region97: #{qkv_attention_legacy.1} parent=95 // pred_check
            _
          $region98: #{qkv_attention_legacy.1} parent=95 // pred_check_branch
            %307 = sbr.rel (0) target = $region100
          $region99: #{qkv_attention_legacy.1} parent=95 // pred_region
            // Predicated region
            $region101: #{qkv_attention_legacy.1} parent=99 // pred_check
              _
            $region102: #{qkv_attention_legacy.1} parent=99 // pred_check_branch
              %309 = sbr.rel (0) target = $region104
            $region103: #{qkv_attention_legacy.1} parent=99 // pred_region
              // Predicated region
              $region116: #{qkv_attention_legacy.1} parent=103 // pred_check
                _
              $region117: #{qkv_attention_legacy.1} parent=103 // pred_check_branch
                %339 = sbr.rel (0) target = $region119
              $region118: #{qkv_attention_legacy.1} parent=103 // pred_region
                loop: start=0, step=1, limit=1
                $region120: #{qkv_attention_legacy.1} parent=118 // loop_pre_header
                  _
                $region121: #{qkv_attention_legacy.1} parent=118 // loop_header
                  %s341 = sphi 0, %s345
                  %p342 = scmp.ge.s32.totalorder %s341, 1
                  %s346 = sphi %s305, %s305
                  %s347 = sphi %s300, %s300
                $region122: #{qkv_attention_legacy.1} parent=118 // loop_header_branch
                  %344 = sbr.rel (%p342) target = $region126
                $region123: #{qkv_attention_legacy.1} parent=118 // loop_body
                  %v348 = vld [vmem:[%s346] sm:$0xff]
                  %349 = vst [vmem:[%s347] sm:$0xff] %v348
                  %v350 = vld [vmem:[%s346 + $0x8] sm:$0xff]
                  %351 = vst [vmem:[%s347 + $0x8] sm:$0xff] %v350
                  %v352 = vld [vmem:[%s346 + $0x10] sm:$0xff]
                  %353 = vst [vmem:[%s347 + $0x10] sm:$0xff] %v352
                  %v354 = vld [vmem:[%s346 + $0x18] sm:$0xff]
                  %355 = vst [vmem:[%s347 + $0x18] sm:$0xff] %v354
                  %v356 = vld [vmem:[%s346 + $0x60] sm:$0xff]
                  %357 = vst [vmem:[%s347 + $0x20] sm:$0xff] %v356
                  %v358 = vld [vmem:[%s346 + $0x68] sm:$0xff]
                  %359 = vst [vmem:[%s347 + $0x28] sm:$0xff] %v358
                  %v360 = vld [vmem:[%s346 + $0x70] sm:$0xff]
                  %361 = vst [vmem:[%s347 + $0x30] sm:$0xff] %v360
                  %v362 = vld [vmem:[%s346 + $0x78] sm:$0xff]
                  %363 = vst [vmem:[%s347 + $0x38] sm:$0xff] %v362
                $region124: #{qkv_attention_legacy.1} parent=118 // loop_footer
                  %s345 = sadd.s32 1, %s341
                $region125: #{qkv_attention_legacy.1} parent=118 // loop_footer_branch
                  %340 = sbr.rel target = $region121
                $region126: #{qkv_attention_legacy.1} parent=118 // loop_exit
                  _
              $region119: #{qkv_attention_legacy.1} parent=103 // pred_fallthru
                _
              // Predicated region
              $region127: #{qkv_attention_legacy.1} parent=103 // pred_check
                _
              $region128: #{qkv_attention_legacy.1} parent=103 // pred_check_branch
                %365 = sbr.rel target = $region130
              $region129: #{qkv_attention_legacy.1} parent=103 // pred_region
                _
              $region130: #{qkv_attention_legacy.1} parent=103 // pred_fallthru
                _
            $region104: #{qkv_attention_legacy.1} parent=99 // pred_fallthru
              _
            // Predicated region
            $region105: #{qkv_attention_legacy.1} parent=99 // pred_check
              _
            $region106: #{qkv_attention_legacy.1} parent=99 // pred_check_branch
              %311 = sbr.rel target = $region108
            $region107: #{qkv_attention_legacy.1} parent=99 // pred_region
              %s313 = ssub.s32 256, 1
              loop: start=0, step=1, limit=1
              $region109: #{qkv_attention_legacy.1} parent=107 // loop_pre_header
                _
              $region110: #{qkv_attention_legacy.1} parent=107 // loop_header
                %s315 = sphi 0, %s319
                %p316 = scmp.ge.s32.totalorder %s315, 1
                %s320 = sphi %s305, %s305
                %s321 = sphi %s300, %s300
              $region111: #{qkv_attention_legacy.1} parent=107 // loop_header_branch
                %318 = sbr.rel (%p316) target = $region115
              $region112: #{qkv_attention_legacy.1} parent=107 // loop_body
                %v322 = vld [vmem:[%s320] sm:%s313]
                %323 = vst [vmem:[%s321] sm:%s313] %v322
                %v324 = vld [vmem:[%s320 + $0x8] sm:%s313]
                %325 = vst [vmem:[%s321 + $0x8] sm:%s313] %v324
                %v326 = vld [vmem:[%s320 + $0x10] sm:%s313]
                %327 = vst [vmem:[%s321 + $0x10] sm:%s313] %v326
                %v328 = vld [vmem:[%s320 + $0x18] sm:%s313]
                %329 = vst [vmem:[%s321 + $0x18] sm:%s313] %v328
                %v330 = vld [vmem:[%s320 + $0x60] sm:%s313]
                %331 = vst [vmem:[%s321 + $0x20] sm:%s313] %v330
                %v332 = vld [vmem:[%s320 + $0x68] sm:%s313]
                %333 = vst [vmem:[%s321 + $0x28] sm:%s313] %v332
                %v334 = vld [vmem:[%s320 + $0x70] sm:%s313]
                %335 = vst [vmem:[%s321 + $0x30] sm:%s313] %v334
                %v336 = vld [vmem:[%s320 + $0x78] sm:%s313]
                %337 = vst [vmem:[%s321 + $0x38] sm:%s313] %v336
              $region113: #{qkv_attention_legacy.1} parent=107 // loop_footer
                %s319 = sadd.s32 1, %s315
              $region114: #{qkv_attention_legacy.1} parent=107 // loop_footer_branch
                %314 = sbr.rel target = $region110
              $region115: #{qkv_attention_legacy.1} parent=107 // loop_exit
                _
            $region108: #{qkv_attention_legacy.1} parent=99 // pred_fallthru
              _
          $region100: #{qkv_attention_legacy.1} parent=95 // pred_fallthru
            _
          %366 = vnop
        $region96: #{qkv_attention_legacy.1} parent=15 // pred_fallthru
          _
      $region16: #{qkv_attention_legacy.1} parent=5 // pred_fallthru
        _
      %p367 = scmp.le.s32.totalorder 1, %s9
      %p368 = scmp.lt.s32.totalorder %s9, 3
      %p369 = pnand %p367, %p368
      %p370 = pneg %p369
      // Predicated region
      $region131: #{qkv_attention_legacy.1} parent=5 // pred_check
        _
      $region132: #{qkv_attention_legacy.1} parent=5 // pred_check_branch
        %372 = sbr.rel (%p369) target = $region134
      $region133: #{qkv_attention_legacy.1} parent=5 // pred_region
        %s373 = ssub.s32 %s9, 1
        %s374 = sand.u32 %s36, 1
        %s375 = sand.u32 %s36, 1
        %s376 = smul.addr %s375, 64
        %s377 = scalar_lea.vmem [#allocation2], %s376
        // Predicated region
        $region135: #{qkv_attention_legacy.1} parent=133 // pred_check
          %p378 = pneg %p49
        $region136: #{qkv_attention_legacy.1} parent=133 // pred_check_branch
          %380 = sbr.rel (%p378) target = $region138
        $region137: #{qkv_attention_legacy.1} parent=133 // pred_region
          _
        $region138: #{qkv_attention_legacy.1} parent=133 // pred_fallthru
          _
        %s381 = sand.u32 %s62, 1
        %s382 = sand.u32 %s62, 1
        %s383 = smul.addr %s382, 64
        %s384 = scalar_lea.vmem [#allocation3], %s383
        // Predicated region
        $region139: #{qkv_attention_legacy.1} parent=133 // pred_check
          %p385 = pneg %p75
        $region140: #{qkv_attention_legacy.1} parent=133 // pred_check_branch
          %387 = sbr.rel (%p385) target = $region142
        $region141: #{qkv_attention_legacy.1} parent=133 // pred_region
          _
        $region142: #{qkv_attention_legacy.1} parent=133 // pred_fallthru
          _
        %s388 = sand.u32 %s88, 1
        %s389 = sand.u32 %s88, 1
        %s390 = smul.addr %s389, 64
        %s391 = scalar_lea.vmem [#allocation4], %s390
        // Predicated region
        $region143: #{qkv_attention_legacy.1} parent=133 // pred_check
          %p392 = pneg %p101
        $region144: #{qkv_attention_legacy.1} parent=133 // pred_check_branch
          %394 = sbr.rel (%p392) target = $region146
        $region145: #{qkv_attention_legacy.1} parent=133 // pred_region
          _
        $region146: #{qkv_attention_legacy.1} parent=133 // pred_fallthru
          _
        %s395 = sand.u32 %s36, 1
        %s396 = sand.u32 %s36, 1
        %s397 = smul.addr %s396, 64
        %s398 = scalar_lea.vmem [#allocation2], %s397
        %p399 = pneg %p49
        %p400 = pneg %p46
        %s401 = sand.u32 %s62, 1
        %s402 = sand.u32 %s62, 1
        %s403 = smul.addr %s402, 64
        %s404 = scalar_lea.vmem [#allocation3], %s403
        %p405 = pneg %p75
        %p406 = pneg %p72
        %s407 = sand.u32 %s88, 1
        %s408 = sand.u32 %s88, 1
        %s409 = smul.addr %s408, 64
        %s410 = scalar_lea.vmem [#allocation4], %s409
        %p411 = pneg %p101
        %p412 = pneg %p98
        %p413 = pneg %p129
        %p414 = pneg %p126
        %s415 = smul.u32 2, %s18
        %p416 = scmp.lt.s32.totalorder %s415, 3
        %s417 = scalar_select %p416, %s415, 3
        %p418 = scmp.lt.s32.totalorder %s19, 0
        %s419 = scalar_select %p418, %s19, 0
        %s420 = smul.addr %s417, 4
        %s421 = sadd.s32 %s419, %s420
        %s422 = smul.addr %s421, 8
        %s423 = scalar_lea.vmem %s3, %s422
        %s424 = smul.u32 2, %s18
        %s425 = smul.u32 2, %s18
        %s426 = smul.u32 2, %s18
        %s427 = smul.u32 2, %s18
        %p428 = scmp.lt.s32.totalorder %s427, 3
        %s429 = scalar_select %p428, %s427, 3
        %p430 = scmp.lt.s32.totalorder %s19, 0
        %s431 = scalar_select %p430, %s19, 0
        %s432 = smul.addr %s429, 4
        %s433 = sadd.s32 %s431, %s432
        %s434 = smul.addr %s433, 8
        %s435 = scalar_lea.vmem %s3, %s434
        %s436 = smul.u32 2, %s18
        %v437 = vld [vmem:[%s377] sm:$0xff]
        %v438 = vld [vmem:[%s377 + $0x8] sm:$0xff]
        %v439 = vld [vmem:[%s377 + $0x10] sm:$0xff]
        %v440 = vld [vmem:[%s377 + $0x18] sm:$0xff]
        %v441 = vmul.f32 %v437, 0.17677669
        %v442 = vmul.f32 %v438, 0.17677669
        %v443 = vmul.f32 %v439, 0.17677669
        %v444 = vmul.f32 %v440, 0.17677669
        %445 = vxpose.xlu0.b32.start [1/16] %v441, 128
        %446 = vxpose.xlu0.b32.cont [2/16] %v442, 128
        %447 = vxpose.xlu0.b32.cont [3/16] %v443, 128
        %448 = vxpose.xlu0.b32.cont [4/16] %v444, 128
        %449 = vxpose.xlu0.b32.cont [5/16] 0.0, 128
        %450 = vxpose.xlu0.b32.cont [6/16] 0.0, 128
        %451 = vxpose.xlu0.b32.cont [7/16] 0.0, 128
        %452 = vxpose.xlu0.b32.cont [8/16] 0.0, 128
        %453 = vxpose.xlu0.b32.cont [9/16] 0.0, 128
        %454 = vxpose.xlu0.b32.cont [10/16] 0.0, 128
        %455 = vxpose.xlu0.b32.cont [11/16] 0.0, 128
        %456 = vxpose.xlu0.b32.cont [12/16] 0.0, 128
        %457 = vxpose.xlu0.b32.cont [13/16] 0.0, 128
        %458 = vxpose.xlu0.b32.cont [14/16] 0.0, 128
        %459 = vxpose.xlu0.b32.cont [15/16] 0.0, 128
        %460 = vxpose.xlu0.b32.end [16/16] 0.0, 128
        %v461 = vpop.trf.xlu0
        %v462 = vpop.trf.xlu0
        %v463 = vpop.trf.xlu0
        %v464 = vpop.trf.xlu0
        %v465 = vpop.trf.xlu0
        %v466 = vpop.trf.xlu0
        %v467 = vpop.trf.xlu0
        %v468 = vpop.trf.xlu0
        %v469 = vpop.trf.xlu0
        %v470 = vpop.trf.xlu0
        %v471 = vpop.trf.xlu0
        %v472 = vpop.trf.xlu0
        %v473 = vpop.trf.xlu0
        %v474 = vpop.trf.xlu0
        %v475 = vpop.trf.xlu0
        %v476 = vpop.trf.xlu0
        %v477 = vld [vmem:[%s384] sm:$0xff]
        %v478 = vld [vmem:[%s384 + $0x8] sm:$0xff]
        %v479 = vld [vmem:[%s384 + $0x10] sm:$0xff]
        %v480 = vld [vmem:[%s384 + $0x18] sm:$0xff]
        %v481 = vld [vmem:[%s391] sm:$0xff]
        %v482 = vld [vmem:[%s391 + $0x8] sm:$0xff]
        %v483 = vld [vmem:[%s391 + $0x10] sm:$0xff]
        %v484 = vld [vmem:[%s391 + $0x18] sm:$0xff]
        %vm485 = vcmask 261120
        %v487 = vsel %vm485, %v461, 0
        %v490 = vsel %vm485, %v462, 0
        %v493 = vsel %vm485, %v463, 0
        %v496 = vsel %vm485, %v464, 0
        %v499 = vsel %vm485, %v465, 0
        %v502 = vsel %vm485, %v466, 0
        %v505 = vsel %vm485, %v467, 0
        %v508 = vsel %vm485, %v468, 0
        %v511 = vsel %vm485, %v469, 0
        %v514 = vsel %vm485, %v470, 0
        %v517 = vsel %vm485, %v471, 0
        %v520 = vsel %vm485, %v472, 0
        %v523 = vsel %vm485, %v473, 0
        %v526 = vsel %vm485, %v474, 0
        %v529 = vsel %vm485, %v475, 0
        %v532 = vsel %vm485, %v476, 0
        %534 = vmatprep.subr.mxu0 0.0
        %535 = vmatpush1.msra.mxu0 0.0
        %536 = vmatprep.subr.mxu0 0.0
        %537 = vmatpush1.msra.mxu0 0.0
        %538 = vmatprep.subr.mxu0 0.0
        %539 = vmatpush1.msra.mxu0 0.0
        %540 = vmatprep.subr.mxu0 0.0
        %541 = vmatpush1.msra.mxu0 0.0
        %542 = vmatprep.subr.mxu0 0.0
        %543 = vmatpush1.msra.mxu0 0.0
        %544 = vmatprep.subr.mxu0 0.0
        %545 = vmatpush1.msra.mxu0 0.0
        %546 = vmatprep.subr.mxu0 0.0
        %547 = vmatpush1.msra.mxu0 0.0
        %548 = vmatprep.subr.mxu0 0.0
        %549 = vmatpush1.msra.mxu0 0.0
        %550 = vmatprep.subr.mxu0 0.0
        %551 = vmatpush1.msra.mxu0 0.0
        %552 = vmatprep.subr.mxu0 0.0
        %553 = vmatpush1.msra.mxu0 0.0
        %554 = vmatprep.subr.mxu0 0.0
        %555 = vmatpush1.msra.mxu0 0.0
        %556 = vmatprep.subr.mxu0 0.0
        %557 = vmatpush1.msra.mxu0 0.0
        %558 = vmatprep.subr.mxu0 0.0
        %559 = vmatpush1.msra.mxu0 %v480
        %560 = vmatprep.subr.mxu0 0.0
        %561 = vmatpush1.msra.mxu0 %v479
        %562 = vmatprep.subr.mxu0 0.0
        %563 = vmatpush1.msra.mxu0 %v478
        %564 = vmatprep.subr.mxu0 0.0
        %565 = vmatpush1.msra.mxu0 %v477
        %566 = vmatprep.subr.mxu0 0.0
        %567 = vmatpush2.msra.mxu0 0.0
        %568 = vmatprep.subr.mxu0 0.0
        %569 = vmatpush2.msra.mxu0 0.0
        %570 = vmatprep.subr.mxu0 0.0
        %571 = vmatpush2.msra.mxu0 0.0
        %572 = vmatprep.subr.mxu0 0.0
        %573 = vmatpush2.msra.mxu0 0.0
        %574 = vmatprep.subr.mxu0 0.0
        %575 = vmatpush2.msra.mxu0 0.0
        %576 = vmatprep.subr.mxu0 0.0
        %577 = vmatpush2.msra.mxu0 0.0
        %578 = vmatprep.subr.mxu0 0.0
        %579 = vmatpush2.msra.mxu0 0.0
        %580 = vmatprep.subr.mxu0 0.0
        %581 = vmatpush2.msra.mxu0 0.0
        %582 = vmatprep.subr.mxu0 0.0
        %583 = vmatpush2.msra.mxu0 0.0
        %584 = vmatprep.subr.mxu0 0.0
        %585 = vmatpush2.msra.mxu0 0.0
        %586 = vmatprep.subr.mxu0 0.0
        %587 = vmatpush2.msra.mxu0 0.0
        %588 = vmatprep.subr.mxu0 0.0
        %589 = vmatpush2.msra.mxu0 0.0
        %590 = vmatprep.subr.mxu0 0.0
        %591 = vmatpush2.msra.mxu0 0.0
        %592 = vmatprep.subr.mxu0 0.0
        %593 = vmatpush2.msra.mxu0 0.0
        %594 = vmatprep.subr.mxu0 0.0
        %595 = vmatpush2.msra.mxu0 0.0
        %596 = vmatprep.subr.mxu0 0.0
        %597 = vmatpush2.msra.mxu0 0.0
        %598 = vmatprep.mubr.f32.mxu0 0.0
        %599 = vmatmul.mubr.f32.gmra.mxu0 %v487
        %v600 = vpop.f32.mrf.mxu0
        %v601 = vadd.f32 0.0, %v600
        %v602 = vpop.f32.mrf.mxu0
        %603 = vmatprep.mubr.f32.mxu0 0.0
        %604 = vmatmul.mubr.f32.gmra.mxu0 %v490
        %v605 = vpop.f32.mrf.mxu0
        %v606 = vadd.f32 0.0, %v605
        %v607 = vpop.f32.mrf.mxu0
        %608 = vmatprep.mubr.f32.mxu0 0.0
        %609 = vmatmul.mubr.f32.gmra.mxu0 %v493
        %v610 = vpop.f32.mrf.mxu0
        %v611 = vadd.f32 0.0, %v610
        %v612 = vpop.f32.mrf.mxu0
        %613 = vmatprep.mubr.f32.mxu0 0.0
        %614 = vmatmul.mubr.f32.gmra.mxu0 %v496
        %v615 = vpop.f32.mrf.mxu0
        %v616 = vadd.f32 0.0, %v615
        %v617 = vpop.f32.mrf.mxu0
        %618 = vmatprep.mubr.f32.mxu0 0.0
        %619 = vmatmul.mubr.f32.gmra.mxu0 %v499
        %v620 = vpop.f32.mrf.mxu0
        %v621 = vadd.f32 0.0, %v620
        %v622 = vpop.f32.mrf.mxu0
        %623 = vmatprep.mubr.f32.mxu0 0.0
        %624 = vmatmul.mubr.f32.gmra.mxu0 %v502
        %v625 = vpop.f32.mrf.mxu0
        %v626 = vadd.f32 0.0, %v625
        %v627 = vpop.f32.mrf.mxu0
        %628 = vmatprep.mubr.f32.mxu0 0.0
        %629 = vmatmul.mubr.f32.gmra.mxu0 %v505
        %v630 = vpop.f32.mrf.mxu0
        %v631 = vadd.f32 0.0, %v630
        %v632 = vpop.f32.mrf.mxu0
        %633 = vmatprep.mubr.f32.mxu0 0.0
        %634 = vmatmul.mubr.f32.gmra.mxu0 %v508
        %v635 = vpop.f32.mrf.mxu0
        %v636 = vadd.f32 0.0, %v635
        %v637 = vpop.f32.mrf.mxu0
        %638 = vmatprep.mubr.f32.mxu0 0.0
        %639 = vmatmul.mubr.f32.gmra.mxu0 %v511
        %v640 = vpop.f32.mrf.mxu0
        %v641 = vadd.f32 0.0, %v640
        %v642 = vpop.f32.mrf.mxu0
        %643 = vmatprep.mubr.f32.mxu0 0.0
        %644 = vmatmul.mubr.f32.gmra.mxu0 %v514
        %v645 = vpop.f32.mrf.mxu0
        %v646 = vadd.f32 0.0, %v645
        %v647 = vpop.f32.mrf.mxu0
        %648 = vmatprep.mubr.f32.mxu0 0.0
        %649 = vmatmul.mubr.f32.gmra.mxu0 %v517
        %v650 = vpop.f32.mrf.mxu0
        %v651 = vadd.f32 0.0, %v650
        %v652 = vpop.f32.mrf.mxu0
        %653 = vmatprep.mubr.f32.mxu0 0.0
        %654 = vmatmul.mubr.f32.gmra.mxu0 %v520
        %v655 = vpop.f32.mrf.mxu0
        %v656 = vadd.f32 0.0, %v655
        %v657 = vpop.f32.mrf.mxu0
        %658 = vmatprep.mubr.f32.mxu0 0.0
        %659 = vmatmul.mubr.f32.gmra.mxu0 %v523
        %v660 = vpop.f32.mrf.mxu0
        %v661 = vadd.f32 0.0, %v660
        %v662 = vpop.f32.mrf.mxu0
        %663 = vmatprep.mubr.f32.mxu0 0.0
        %664 = vmatmul.mubr.f32.gmra.mxu0 %v526
        %v665 = vpop.f32.mrf.mxu0
        %v666 = vadd.f32 0.0, %v665
        %v667 = vpop.f32.mrf.mxu0
        %668 = vmatprep.mubr.f32.mxu0 0.0
        %669 = vmatmul.mubr.f32.gmra.mxu0 %v529
        %v670 = vpop.f32.mrf.mxu0
        %v671 = vadd.f32 0.0, %v670
        %v672 = vpop.f32.mrf.mxu0
        %673 = vmatprep.mubr.f32.mxu0 0.0
        %674 = vmatmul.mubr.f32.gmra.mxu0 %v532
        %v675 = vpop.f32.mrf.mxu0
        %v676 = vadd.f32 0.0, %v675
        %v677 = vpop.f32.mrf.mxu0
        %678 = vdwg.mxu0
        %v679 = vlaneseq
        %v680 = vand.u32 %v679, 127
        %vm681 = vcmp.lt.s32.totalorder %v680, 16
        %v682 = vsel %vm681, 1, 0
        %vm683 = vcmp.eq.s32.totalorder %v682, 1
        %v684 = vsel %vm683, %v601, -1e+30
        %v685 = vsel %vm683, %v606, -1e+30
        %v686 = vsel %vm683, %v611, -1e+30
        %v687 = vsel %vm683, %v616, -1e+30
        %v688 = vsel %vm683, %v621, -1e+30
        %v689 = vsel %vm683, %v626, -1e+30
        %v690 = vsel %vm683, %v631, -1e+30
        %v691 = vsel %vm683, %v636, -1e+30
        %v692 = vsel %vm683, %v641, -1e+30
        %v693 = vsel %vm683, %v646, -1e+30
        %v694 = vsel %vm683, %v651, -1e+30
        %v695 = vsel %vm683, %v656, -1e+30
        %v696 = vsel %vm683, %v661, -1e+30
        %v697 = vsel %vm683, %v666, -1e+30
        %v698 = vsel %vm683, %v671, -1e+30
        %v699 = vsel %vm683, %v676, -1e+30
        %700 = vmax.xlane.f32.xlu0 %v684
        %v701 = vpop.xlane.xlu0 %700
        %702 = vmax.xlane.f32.xlu0 %v685
        %v703 = vpop.xlane.xlu0 %702
        %704 = vmax.xlane.f32.xlu0 %v686
        %v705 = vpop.xlane.xlu0 %704
        %706 = vmax.xlane.f32.xlu0 %v687
        %v707 = vpop.xlane.xlu0 %706
        %708 = vmax.xlane.f32.xlu0 %v688
        %v709 = vpop.xlane.xlu0 %708
        %710 = vmax.xlane.f32.xlu0 %v689
        %v711 = vpop.xlane.xlu0 %710
        %712 = vmax.xlane.f32.xlu0 %v690
        %v713 = vpop.xlane.xlu0 %712
        %714 = vmax.xlane.f32.xlu0 %v691
        %v715 = vpop.xlane.xlu0 %714
        %716 = vmax.xlane.f32.xlu0 %v692
        %v717 = vpop.xlane.xlu0 %716
        %718 = vmax.xlane.f32.xlu0 %v693
        %v719 = vpop.xlane.xlu0 %718
        %720 = vmax.xlane.f32.xlu0 %v694
        %v721 = vpop.xlane.xlu0 %720
        %722 = vmax.xlane.f32.xlu0 %v695
        %v723 = vpop.xlane.xlu0 %722
        %724 = vmax.xlane.f32.xlu0 %v696
        %v725 = vpop.xlane.xlu0 %724
        %726 = vmax.xlane.f32.xlu0 %v697
        %v727 = vpop.xlane.xlu0 %726
        %728 = vmax.xlane.f32.xlu0 %v698
        %v729 = vpop.xlane.xlu0 %728
        %730 = vmax.xlane.f32.xlu0 %v699
        %v731 = vpop.xlane.xlu0 %730
        %v732 = vsub.f32 -inf, %v701
        %v733 = vsub.f32 -inf, %v703
        %v734 = vsub.f32 -inf, %v705
        %v735 = vsub.f32 -inf, %v707
        %v736 = vsub.f32 -inf, %v709
        %v737 = vsub.f32 -inf, %v711
        %v738 = vsub.f32 -inf, %v713
        %v739 = vsub.f32 -inf, %v715
        %v740 = vsub.f32 -inf, %v717
        %v741 = vsub.f32 -inf, %v719
        %v742 = vsub.f32 -inf, %v721
        %v743 = vsub.f32 -inf, %v723
        %v744 = vsub.f32 -inf, %v725
        %v745 = vsub.f32 -inf, %v727
        %v746 = vsub.f32 -inf, %v729
        %v747 = vsub.f32 -inf, %v731
        %v748 = vmul.f32 %v732, 1.442695
        %v749 = vpow.pop %v748
        %v750 = vmul.f32 %v733, 1.442695
        %v751 = vpow.pop %v750
        %v752 = vmul.f32 %v734, 1.442695
        %v753 = vpow.pop %v752
        %v754 = vmul.f32 %v735, 1.442695
        %v755 = vpow.pop %v754
        %v756 = vmul.f32 %v736, 1.442695
        %v757 = vpow.pop %v756
        %v758 = vmul.f32 %v737, 1.442695
        %v759 = vpow.pop %v758
        %v760 = vmul.f32 %v738, 1.442695
        %v761 = vpow.pop %v760
        %v762 = vmul.f32 %v739, 1.442695
        %v763 = vpow.pop %v762
        %v764 = vmul.f32 %v740, 1.442695
        %v765 = vpow.pop %v764
        %v766 = vmul.f32 %v741, 1.442695
        %v767 = vpow.pop %v766
        %v768 = vmul.f32 %v742, 1.442695
        %v769 = vpow.pop %v768
        %v770 = vmul.f32 %v743, 1.442695
        %v771 = vpow.pop %v770
        %v772 = vmul.f32 %v744, 1.442695
        %v773 = vpow.pop %v772
        %v774 = vmul.f32 %v745, 1.442695
        %v775 = vpow.pop %v774
        %v776 = vmul.f32 %v746, 1.442695
        %v777 = vpow.pop %v776
        %v778 = vmul.f32 %v747, 1.442695
        %v779 = vpow.pop %v778
        %v780 = vsub.f32 %v684, %v701
        %v781 = vsub.f32 %v685, %v703
        %v782 = vsub.f32 %v686, %v705
        %v783 = vsub.f32 %v687, %v707
        %v784 = vsub.f32 %v688, %v709
        %v785 = vsub.f32 %v689, %v711
        %v786 = vsub.f32 %v690, %v713
        %v787 = vsub.f32 %v691, %v715
        %v788 = vsub.f32 %v692, %v717
        %v789 = vsub.f32 %v693, %v719
        %v790 = vsub.f32 %v694, %v721
        %v791 = vsub.f32 %v695, %v723
        %v792 = vsub.f32 %v696, %v725
        %v793 = vsub.f32 %v697, %v727
        %v794 = vsub.f32 %v698, %v729
        %v795 = vsub.f32 %v699, %v731
        %v796 = vmul.f32 %v780, 1.442695
        %v797 = vpow.pop %v796
        %v798 = vmul.f32 %v781, 1.442695
        %v799 = vpow.pop %v798
        %v800 = vmul.f32 %v782, 1.442695
        %v801 = vpow.pop %v800
        %v802 = vmul.f32 %v783, 1.442695
        %v803 = vpow.pop %v802
        %v804 = vmul.f32 %v784, 1.442695
        %v805 = vpow.pop %v804
        %v806 = vmul.f32 %v785, 1.442695
        %v807 = vpow.pop %v806
        %v808 = vmul.f32 %v786, 1.442695
        %v809 = vpow.pop %v808
        %v810 = vmul.f32 %v787, 1.442695
        %v811 = vpow.pop %v810
        %v812 = vmul.f32 %v788, 1.442695
        %v813 = vpow.pop %v812
        %v814 = vmul.f32 %v789, 1.442695
        %v815 = vpow.pop %v814
        %v816 = vmul.f32 %v790, 1.442695
        %v817 = vpow.pop %v816
        %v818 = vmul.f32 %v791, 1.442695
        %v819 = vpow.pop %v818
        %v820 = vmul.f32 %v792, 1.442695
        %v821 = vpow.pop %v820
        %v822 = vmul.f32 %v793, 1.442695
        %v823 = vpow.pop %v822
        %v824 = vmul.f32 %v794, 1.442695
        %v825 = vpow.pop %v824
        %v826 = vmul.f32 %v795, 1.442695
        %v827 = vpow.pop %v826
        %v828 = vmul.f32 %v749, 0.0
        %v829 = vmul.f32 %v751, 0.0
        %v830 = vmul.f32 %v753, 0.0
        %v831 = vmul.f32 %v755, 0.0
        %v832 = vmul.f32 %v757, 0.0
        %v833 = vmul.f32 %v759, 0.0
        %v834 = vmul.f32 %v761, 0.0
        %v835 = vmul.f32 %v763, 0.0
        %v836 = vmul.f32 %v765, 0.0
        %v837 = vmul.f32 %v767, 0.0
        %v838 = vmul.f32 %v769, 0.0
        %v839 = vmul.f32 %v771, 0.0
        %v840 = vmul.f32 %v773, 0.0
        %v841 = vmul.f32 %v775, 0.0
        %v842 = vmul.f32 %v777, 0.0
        %v843 = vmul.f32 %v779, 0.0
        %844 = vadd.xlane.f32.xlu0 %v797
        %v845 = vpop.xlane.xlu0 %844
        %846 = vadd.xlane.f32.xlu0 %v799
        %v847 = vpop.xlane.xlu0 %846
        %848 = vadd.xlane.f32.xlu0 %v801
        %v849 = vpop.xlane.xlu0 %848
        %850 = vadd.xlane.f32.xlu0 %v803
        %v851 = vpop.xlane.xlu0 %850
        %852 = vadd.xlane.f32.xlu0 %v805
        %v853 = vpop.xlane.xlu0 %852
        %854 = vadd.xlane.f32.xlu0 %v807
        %v855 = vpop.xlane.xlu0 %854
        %856 = vadd.xlane.f32.xlu0 %v809
        %v857 = vpop.xlane.xlu0 %856
        %858 = vadd.xlane.f32.xlu0 %v811
        %v859 = vpop.xlane.xlu0 %858
        %860 = vadd.xlane.f32.xlu0 %v813
        %v861 = vpop.xlane.xlu0 %860
        %862 = vadd.xlane.f32.xlu0 %v815
        %v863 = vpop.xlane.xlu0 %862
        %864 = vadd.xlane.f32.xlu0 %v817
        %v865 = vpop.xlane.xlu0 %864
        %866 = vadd.xlane.f32.xlu0 %v819
        %v867 = vpop.xlane.xlu0 %866
        %868 = vadd.xlane.f32.xlu0 %v821
        %v869 = vpop.xlane.xlu0 %868
        %870 = vadd.xlane.f32.xlu0 %v823
        %v871 = vpop.xlane.xlu0 %870
        %872 = vadd.xlane.f32.xlu0 %v825
        %v873 = vpop.xlane.xlu0 %872
        %874 = vadd.xlane.f32.xlu0 %v827
        %v875 = vpop.xlane.xlu0 %874
        %v876 = vadd.f32 %v828, %v845
        %v877 = vadd.f32 %v829, %v847
        %v878 = vadd.f32 %v830, %v849
        %v879 = vadd.f32 %v831, %v851
        %v880 = vadd.f32 %v832, %v853
        %v881 = vadd.f32 %v833, %v855
        %v882 = vadd.f32 %v834, %v857
        %v883 = vadd.f32 %v835, %v859
        %v884 = vadd.f32 %v836, %v861
        %v885 = vadd.f32 %v837, %v863
        %v886 = vadd.f32 %v838, %v865
        %v887 = vadd.f32 %v839, %v867
        %v888 = vadd.f32 %v840, %v869
        %v889 = vadd.f32 %v841, %v871
        %v890 = vadd.f32 %v842, %v873
        %v891 = vadd.f32 %v843, %v875
        %892 = vmatprep.subr.mxu0 0.0
        %893 = vmatpush1.xpose.msra.mxu0 0.0
        %894 = vmatprep.subr.mxu0 0.0
        %895 = vmatpush1.xpose.msra.mxu0 0.0
        %896 = vmatprep.subr.mxu0 0.0
        %897 = vmatpush1.xpose.msra.mxu0 0.0
        %898 = vmatprep.subr.mxu0 0.0
        %899 = vmatpush1.xpose.msra.mxu0 0.0
        %900 = vmatprep.subr.mxu0 0.0
        %901 = vmatpush1.xpose.msra.mxu0 0.0
        %902 = vmatprep.subr.mxu0 0.0
        %903 = vmatpush1.xpose.msra.mxu0 0.0
        %904 = vmatprep.subr.mxu0 0.0
        %905 = vmatpush1.xpose.msra.mxu0 0.0
        %906 = vmatprep.subr.mxu0 0.0
        %907 = vmatpush1.xpose.msra.mxu0 0.0
        %908 = vmatprep.subr.mxu0 0.0
        %909 = vmatpush1.xpose.msra.mxu0 0.0
        %910 = vmatprep.subr.mxu0 0.0
        %911 = vmatpush1.xpose.msra.mxu0 0.0
        %912 = vmatprep.subr.mxu0 0.0
        %913 = vmatpush1.xpose.msra.mxu0 0.0
        %914 = vmatprep.subr.mxu0 0.0
        %915 = vmatpush1.xpose.msra.mxu0 0.0
        %916 = vmatprep.subr.mxu0 0.0
        %917 = vmatpush1.xpose.msra.mxu0 %v484
        %918 = vmatprep.subr.mxu0 0.0
        %919 = vmatpush1.xpose.msra.mxu0 %v483
        %920 = vmatprep.subr.mxu0 0.0
        %921 = vmatpush1.xpose.msra.mxu0 %v482
        %922 = vmatprep.subr.mxu0 0.0
        %923 = vmatpush1.xpose.msra.mxu0 %v481
        %924 = vmatprep.subr.mxu0 0.0
        %925 = vmatpush2.xpose.msra.mxu0 0.0
        %926 = vmatprep.subr.mxu0 0.0
        %927 = vmatpush2.xpose.msra.mxu0 0.0
        %928 = vmatprep.subr.mxu0 0.0
        %929 = vmatpush2.xpose.msra.mxu0 0.0
        %930 = vmatprep.subr.mxu0 0.0
        %931 = vmatpush2.xpose.msra.mxu0 0.0
        %932 = vmatprep.subr.mxu0 0.0
        %933 = vmatpush2.xpose.msra.mxu0 0.0
        %934 = vmatprep.subr.mxu0 0.0
        %935 = vmatpush2.xpose.msra.mxu0 0.0
        %936 = vmatprep.subr.mxu0 0.0
        %937 = vmatpush2.xpose.msra.mxu0 0.0
        %938 = vmatprep.subr.mxu0 0.0
        %939 = vmatpush2.xpose.msra.mxu0 0.0
        %940 = vmatprep.subr.mxu0 0.0
        %941 = vmatpush2.xpose.msra.mxu0 0.0
        %942 = vmatprep.subr.mxu0 0.0
        %943 = vmatpush2.xpose.msra.mxu0 0.0
        %944 = vmatprep.subr.mxu0 0.0
        %945 = vmatpush2.xpose.msra.mxu0 0.0
        %946 = vmatprep.subr.mxu0 0.0
        %947 = vmatpush2.xpose.msra.mxu0 0.0
        %948 = vmatprep.subr.mxu0 0.0
        %949 = vmatpush2.xpose.msra.mxu0 0.0
        %950 = vmatprep.subr.mxu0 0.0
        %951 = vmatpush2.xpose.msra.mxu0 0.0
        %952 = vmatprep.subr.mxu0 0.0
        %953 = vmatpush2.xpose.msra.mxu0 0.0
        %954 = vmatprep.subr.mxu0 0.0
        %955 = vmatpush2.xpose.msra.mxu0 0.0
        %956 = vmatprep.mubr.f32.mxu0 0.0
        %957 = vmatmul.mubr.f32.gmra.mxu0 %v797
        %v958 = vpop.f32.mrf.mxu0
        %v959 = vadd.f32 0.0, %v958
        %v960 = vpop.f32.mrf.mxu0
        %961 = vmatprep.mubr.f32.mxu0 0.0
        %962 = vmatmul.mubr.f32.gmra.mxu0 %v799
        %v963 = vpop.f32.mrf.mxu0
        %v964 = vadd.f32 0.0, %v963
        %v965 = vpop.f32.mrf.mxu0
        %966 = vmatprep.mubr.f32.mxu0 0.0
        %967 = vmatmul.mubr.f32.gmra.mxu0 %v801
        %v968 = vpop.f32.mrf.mxu0
        %v969 = vadd.f32 0.0, %v968
        %v970 = vpop.f32.mrf.mxu0
        %971 = vmatprep.mubr.f32.mxu0 0.0
        %972 = vmatmul.mubr.f32.gmra.mxu0 %v803
        %v973 = vpop.f32.mrf.mxu0
        %v974 = vadd.f32 0.0, %v973
        %v975 = vpop.f32.mrf.mxu0
        %976 = vmatprep.mubr.f32.mxu0 0.0
        %977 = vmatmul.mubr.f32.gmra.mxu0 %v805
        %v978 = vpop.f32.mrf.mxu0
        %v979 = vadd.f32 0.0, %v978
        %v980 = vpop.f32.mrf.mxu0
        %981 = vmatprep.mubr.f32.mxu0 0.0
        %982 = vmatmul.mubr.f32.gmra.mxu0 %v807
        %v983 = vpop.f32.mrf.mxu0
        %v984 = vadd.f32 0.0, %v983
        %v985 = vpop.f32.mrf.mxu0
        %986 = vmatprep.mubr.f32.mxu0 0.0
        %987 = vmatmul.mubr.f32.gmra.mxu0 %v809
        %v988 = vpop.f32.mrf.mxu0
        %v989 = vadd.f32 0.0, %v988
        %v990 = vpop.f32.mrf.mxu0
        %991 = vmatprep.mubr.f32.mxu0 0.0
        %992 = vmatmul.mubr.f32.gmra.mxu0 %v811
        %v993 = vpop.f32.mrf.mxu0
        %v994 = vadd.f32 0.0, %v993
        %v995 = vpop.f32.mrf.mxu0
        %996 = vmatprep.mubr.f32.mxu0 0.0
        %997 = vmatmul.mubr.f32.gmra.mxu0 %v813
        %v998 = vpop.f32.mrf.mxu0
        %v999 = vadd.f32 0.0, %v998
        %v1000 = vpop.f32.mrf.mxu0
        %1001 = vmatprep.mubr.f32.mxu0 0.0
        %1002 = vmatmul.mubr.f32.gmra.mxu0 %v815
        %v1003 = vpop.f32.mrf.mxu0
        %v1004 = vadd.f32 0.0, %v1003
        %v1005 = vpop.f32.mrf.mxu0
        %1006 = vmatprep.mubr.f32.mxu0 0.0
        %1007 = vmatmul.mubr.f32.gmra.mxu0 %v817
        %v1008 = vpop.f32.mrf.mxu0
        %v1009 = vadd.f32 0.0, %v1008
        %v1010 = vpop.f32.mrf.mxu0
        %1011 = vmatprep.mubr.f32.mxu0 0.0
        %1012 = vmatmul.mubr.f32.gmra.mxu0 %v819
        %v1013 = vpop.f32.mrf.mxu0
        %v1014 = vadd.f32 0.0, %v1013
        %v1015 = vpop.f32.mrf.mxu0
        %1016 = vmatprep.mubr.f32.mxu0 0.0
        %1017 = vmatmul.mubr.f32.gmra.mxu0 %v821
        %v1018 = vpop.f32.mrf.mxu0
        %v1019 = vadd.f32 0.0, %v1018
        %v1020 = vpop.f32.mrf.mxu0
        %1021 = vmatprep.mubr.f32.mxu0 0.0
        %1022 = vmatmul.mubr.f32.gmra.mxu0 %v823
        %v1023 = vpop.f32.mrf.mxu0
        %v1024 = vadd.f32 0.0, %v1023
        %v1025 = vpop.f32.mrf.mxu0
        %1026 = vmatprep.mubr.f32.mxu0 0.0
        %1027 = vmatmul.mubr.f32.gmra.mxu0 %v825
        %v1028 = vpop.f32.mrf.mxu0
        %v1029 = vadd.f32 0.0, %v1028
        %v1030 = vpop.f32.mrf.mxu0
        %1031 = vmatprep.mubr.f32.mxu0 0.0
        %1032 = vmatmul.mubr.f32.gmra.mxu0 %v827
        %v1033 = vpop.f32.mrf.mxu0
        %v1034 = vadd.f32 0.0, %v1033
        %v1035 = vpop.f32.mrf.mxu0
        %1036 = vdwg.mxu0
        %v1037 = vadd.f32 %v828, %v959
        %v1038 = vadd.f32 %v829, %v964
        %v1039 = vadd.f32 %v830, %v969
        %v1040 = vadd.f32 %v831, %v974
        %v1041 = vadd.f32 %v832, %v979
        %v1042 = vadd.f32 %v833, %v984
        %v1043 = vadd.f32 %v834, %v989
        %v1044 = vadd.f32 %v835, %v994
        %v1045 = vadd.f32 %v836, %v999
        %v1046 = vadd.f32 %v837, %v1004
        %v1047 = vadd.f32 %v838, %v1009
        %v1048 = vadd.f32 %v839, %v1014
        %v1049 = vadd.f32 %v840, %v1019
        %v1050 = vadd.f32 %v841, %v1024
        %v1051 = vadd.f32 %v842, %v1029
        %v1052 = vadd.f32 %v843, %v1034
        %v1053 = vrcp.pop %v876
        %v1054 = vrcp.pop %v877
        %v1055 = vrcp.pop %v878
        %v1056 = vrcp.pop %v879
        %v1057 = vrcp.pop %v880
        %v1058 = vrcp.pop %v881
        %v1059 = vrcp.pop %v882
        %v1060 = vrcp.pop %v883
        %v1061 = vrcp.pop %v884
        %v1062 = vrcp.pop %v885
        %v1063 = vrcp.pop %v886
        %v1064 = vrcp.pop %v887
        %v1065 = vrcp.pop %v888
        %v1066 = vrcp.pop %v889
        %v1067 = vrcp.pop %v890
        %v1068 = vrcp.pop %v891
        %v1069 = vmul.f32 %v1037, %v1053
        %v1070 = vmul.f32 %v1038, %v1054
        %v1071 = vmul.f32 %v1039, %v1055
        %v1072 = vmul.f32 %v1040, %v1056
        %v1073 = vmul.f32 %v1041, %v1057
        %v1074 = vmul.f32 %v1042, %v1058
        %v1075 = vmul.f32 %v1043, %v1059
        %v1076 = vmul.f32 %v1044, %v1060
        %v1077 = vmul.f32 %v1045, %v1061
        %v1078 = vmul.f32 %v1046, %v1062
        %v1079 = vmul.f32 %v1047, %v1063
        %v1080 = vmul.f32 %v1048, %v1064
        %v1081 = vmul.f32 %v1049, %v1065
        %v1082 = vmul.f32 %v1050, %v1066
        %v1083 = vmul.f32 %v1051, %v1067
        %v1084 = vmul.f32 %v1052, %v1068
        %1085 = vxpose.xlu0.b32.start [1/16] %v1069, 128
        %1086 = vxpose.xlu0.b32.cont [2/16] %v1070, 128
        %1087 = vxpose.xlu0.b32.cont [3/16] %v1071, 128
        %1088 = vxpose.xlu0.b32.cont [4/16] %v1072, 128
        %1089 = vxpose.xlu0.b32.cont [5/16] %v1073, 128
        %1090 = vxpose.xlu0.b32.cont [6/16] %v1074, 128
        %1091 = vxpose.xlu0.b32.cont [7/16] %v1075, 128
        %1092 = vxpose.xlu0.b32.cont [8/16] %v1076, 128
        %1093 = vxpose.xlu0.b32.cont [9/16] %v1077, 128
        %1094 = vxpose.xlu0.b32.cont [10/16] %v1078, 128
        %1095 = vxpose.xlu0.b32.cont [11/16] %v1079, 128
        %1096 = vxpose.xlu0.b32.cont [12/16] %v1080, 128
        %1097 = vxpose.xlu0.b32.cont [13/16] %v1081, 128
        %1098 = vxpose.xlu0.b32.cont [14/16] %v1082, 128
        %1099 = vxpose.xlu0.b32.cont [15/16] %v1083, 128
        %1100 = vxpose.xlu0.b32.end [16/16] %v1084, 128
        %v1101 = vpop.trf.xlu0
        %v1102 = vpop.trf.xlu0
        %v1103 = vpop.trf.xlu0
        %v1104 = vpop.trf.xlu0
        %v1105 = vpop.trf.xlu0
        %v1106 = vpop.trf.xlu0
        %v1107 = vpop.trf.xlu0
        %v1108 = vpop.trf.xlu0
        %v1109 = vpop.trf.xlu0
        %v1110 = vpop.trf.xlu0
        %v1111 = vpop.trf.xlu0
        %v1112 = vpop.trf.xlu0
        %v1113 = vpop.trf.xlu0
        %v1114 = vpop.trf.xlu0
        %v1115 = vpop.trf.xlu0
        %v1116 = vpop.trf.xlu0
        %1117 = vst [vmem:[%s435] sm:$0xff] %v1101
        %1118 = vst [vmem:[%s435 + $0x8] sm:$0xff] %v1102
        %1119 = vst [vmem:[%s435 + $0x10] sm:$0xff] %v1103
        %1120 = vst [vmem:[%s435 + $0x18] sm:$0xff] %v1104
        %s1121 = scalar_lea.vmem %s377, 32 [#allocation2]
        %v1122 = vld [vmem:[%s1121] sm:$0xff]
        %v1123 = vld [vmem:[%s1121 + $0x8] sm:$0xff]
        %v1124 = vld [vmem:[%s1121 + $0x10] sm:$0xff]
        %v1125 = vld [vmem:[%s1121 + $0x18] sm:$0xff]
        %v1126 = vmul.f32 %v1122, 0.17677669
        %v1127 = vmul.f32 %v1123, 0.17677669
        %v1128 = vmul.f32 %v1124, 0.17677669
        %v1129 = vmul.f32 %v1125, 0.17677669
        %1130 = vxpose.xlu0.b32.start [1/16] %v1126, 128
        %1131 = vxpose.xlu0.b32.cont [2/16] %v1127, 128
        %1132 = vxpose.xlu0.b32.cont [3/16] %v1128, 128
        %1133 = vxpose.xlu0.b32.cont [4/16] %v1129, 128
        %1134 = vxpose.xlu0.b32.cont [5/16] 0.0, 128
        %1135 = vxpose.xlu0.b32.cont [6/16] 0.0, 128
        %1136 = vxpose.xlu0.b32.cont [7/16] 0.0, 128
        %1137 = vxpose.xlu0.b32.cont [8/16] 0.0, 128
        %1138 = vxpose.xlu0.b32.cont [9/16] 0.0, 128
        %1139 = vxpose.xlu0.b32.cont [10/16] 0.0, 128
        %1140 = vxpose.xlu0.b32.cont [11/16] 0.0, 128
        %1141 = vxpose.xlu0.b32.cont [12/16] 0.0, 128
        %1142 = vxpose.xlu0.b32.cont [13/16] 0.0, 128
        %1143 = vxpose.xlu0.b32.cont [14/16] 0.0, 128
        %1144 = vxpose.xlu0.b32.cont [15/16] 0.0, 128
        %1145 = vxpose.xlu0.b32.end [16/16] 0.0, 128
        %v1146 = vpop.trf.xlu0
        %v1147 = vpop.trf.xlu0
        %v1148 = vpop.trf.xlu0
        %v1149 = vpop.trf.xlu0
        %v1150 = vpop.trf.xlu0
        %v1151 = vpop.trf.xlu0
        %v1152 = vpop.trf.xlu0
        %v1153 = vpop.trf.xlu0
        %v1154 = vpop.trf.xlu0
        %v1155 = vpop.trf.xlu0
        %v1156 = vpop.trf.xlu0
        %v1157 = vpop.trf.xlu0
        %v1158 = vpop.trf.xlu0
        %v1159 = vpop.trf.xlu0
        %v1160 = vpop.trf.xlu0
        %v1161 = vpop.trf.xlu0
        %s1162 = scalar_lea.vmem %s384, 32 [#allocation3]
        %v1163 = vld [vmem:[%s1162] sm:$0xff]
        %v1164 = vld [vmem:[%s1162 + $0x8] sm:$0xff]
        %v1165 = vld [vmem:[%s1162 + $0x10] sm:$0xff]
        %v1166 = vld [vmem:[%s1162 + $0x18] sm:$0xff]
        %s1167 = scalar_lea.vmem %s391, 32 [#allocation4]
        %v1168 = vld [vmem:[%s1167] sm:$0xff]
        %v1169 = vld [vmem:[%s1167 + $0x8] sm:$0xff]
        %v1170 = vld [vmem:[%s1167 + $0x10] sm:$0xff]
        %v1171 = vld [vmem:[%s1167 + $0x18] sm:$0xff]
        %v1173 = vsel %vm485, %v1146, 0
        %v1176 = vsel %vm485, %v1147, 0
        %v1179 = vsel %vm485, %v1148, 0
        %v1182 = vsel %vm485, %v1149, 0
        %v1185 = vsel %vm485, %v1150, 0
        %v1188 = vsel %vm485, %v1151, 0
        %v1191 = vsel %vm485, %v1152, 0
        %v1194 = vsel %vm485, %v1153, 0
        %v1197 = vsel %vm485, %v1154, 0
        %v1200 = vsel %vm485, %v1155, 0
        %v1203 = vsel %vm485, %v1156, 0
        %v1206 = vsel %vm485, %v1157, 0
        %v1209 = vsel %vm485, %v1158, 0
        %v1212 = vsel %vm485, %v1159, 0
        %v1215 = vsel %vm485, %v1160, 0
        %v1218 = vsel %vm485, %v1161, 0
        %1220 = vmatprep.subr.mxu0 0.0
        %1221 = vmatpush1.msra.mxu0 0.0
        %1222 = vmatprep.subr.mxu0 0.0
        %1223 = vmatpush1.msra.mxu0 0.0
        %1224 = vmatprep.subr.mxu0 0.0
        %1225 = vmatpush1.msra.mxu0 0.0
        %1226 = vmatprep.subr.mxu0 0.0
        %1227 = vmatpush1.msra.mxu0 0.0
        %1228 = vmatprep.subr.mxu0 0.0
        %1229 = vmatpush1.msra.mxu0 0.0
        %1230 = vmatprep.subr.mxu0 0.0
        %1231 = vmatpush1.msra.mxu0 0.0
        %1232 = vmatprep.subr.mxu0 0.0
        %1233 = vmatpush1.msra.mxu0 0.0
        %1234 = vmatprep.subr.mxu0 0.0
        %1235 = vmatpush1.msra.mxu0 0.0
        %1236 = vmatprep.subr.mxu0 0.0
        %1237 = vmatpush1.msra.mxu0 0.0
        %1238 = vmatprep.subr.mxu0 0.0
        %1239 = vmatpush1.msra.mxu0 0.0
        %1240 = vmatprep.subr.mxu0 0.0
        %1241 = vmatpush1.msra.mxu0 0.0
        %1242 = vmatprep.subr.mxu0 0.0
        %1243 = vmatpush1.msra.mxu0 0.0
        %1244 = vmatprep.subr.mxu0 0.0
        %1245 = vmatpush1.msra.mxu0 %v1166
        %1246 = vmatprep.subr.mxu0 0.0
        %1247 = vmatpush1.msra.mxu0 %v1165
        %1248 = vmatprep.subr.mxu0 0.0
        %1249 = vmatpush1.msra.mxu0 %v1164
        %1250 = vmatprep.subr.mxu0 0.0
        %1251 = vmatpush1.msra.mxu0 %v1163
        %1252 = vmatprep.subr.mxu0 0.0
        %1253 = vmatpush2.msra.mxu0 0.0
        %1254 = vmatprep.subr.mxu0 0.0
        %1255 = vmatpush2.msra.mxu0 0.0
        %1256 = vmatprep.subr.mxu0 0.0
        %1257 = vmatpush2.msra.mxu0 0.0
        %1258 = vmatprep.subr.mxu0 0.0
        %1259 = vmatpush2.msra.mxu0 0.0
        %1260 = vmatprep.subr.mxu0 0.0
        %1261 = vmatpush2.msra.mxu0 0.0
        %1262 = vmatprep.subr.mxu0 0.0
        %1263 = vmatpush2.msra.mxu0 0.0
        %1264 = vmatprep.subr.mxu0 0.0
        %1265 = vmatpush2.msra.mxu0 0.0
        %1266 = vmatprep.subr.mxu0 0.0
        %1267 = vmatpush2.msra.mxu0 0.0
        %1268 = vmatprep.subr.mxu0 0.0
        %1269 = vmatpush2.msra.mxu0 0.0
        %1270 = vmatprep.subr.mxu0 0.0
        %1271 = vmatpush2.msra.mxu0 0.0
        %1272 = vmatprep.subr.mxu0 0.0
        %1273 = vmatpush2.msra.mxu0 0.0
        %1274 = vmatprep.subr.mxu0 0.0
        %1275 = vmatpush2.msra.mxu0 0.0
        %1276 = vmatprep.subr.mxu0 0.0
        %1277 = vmatpush2.msra.mxu0 0.0
        %1278 = vmatprep.subr.mxu0 0.0
        %1279 = vmatpush2.msra.mxu0 0.0
        %1280 = vmatprep.subr.mxu0 0.0
        %1281 = vmatpush2.msra.mxu0 0.0
        %1282 = vmatprep.subr.mxu0 0.0
        %1283 = vmatpush2.msra.mxu0 0.0
        %1284 = vmatprep.mubr.f32.mxu0 0.0
        %1285 = vmatmul.mubr.f32.gmra.mxu0 %v1173
        %v1286 = vpop.f32.mrf.mxu0
        %v1287 = vadd.f32 0.0, %v1286
        %v1288 = vpop.f32.mrf.mxu0
        %1289 = vmatprep.mubr.f32.mxu0 0.0
        %1290 = vmatmul.mubr.f32.gmra.mxu0 %v1176
        %v1291 = vpop.f32.mrf.mxu0
        %v1292 = vadd.f32 0.0, %v1291
        %v1293 = vpop.f32.mrf.mxu0
        %1294 = vmatprep.mubr.f32.mxu0 0.0
        %1295 = vmatmul.mubr.f32.gmra.mxu0 %v1179
        %v1296 = vpop.f32.mrf.mxu0
        %v1297 = vadd.f32 0.0, %v1296
        %v1298 = vpop.f32.mrf.mxu0
        %1299 = vmatprep.mubr.f32.mxu0 0.0
        %1300 = vmatmul.mubr.f32.gmra.mxu0 %v1182
        %v1301 = vpop.f32.mrf.mxu0
        %v1302 = vadd.f32 0.0, %v1301
        %v1303 = vpop.f32.mrf.mxu0
        %1304 = vmatprep.mubr.f32.mxu0 0.0
        %1305 = vmatmul.mubr.f32.gmra.mxu0 %v1185
        %v1306 = vpop.f32.mrf.mxu0
        %v1307 = vadd.f32 0.0, %v1306
        %v1308 = vpop.f32.mrf.mxu0
        %1309 = vmatprep.mubr.f32.mxu0 0.0
        %1310 = vmatmul.mubr.f32.gmra.mxu0 %v1188
        %v1311 = vpop.f32.mrf.mxu0
        %v1312 = vadd.f32 0.0, %v1311
        %v1313 = vpop.f32.mrf.mxu0
        %1314 = vmatprep.mubr.f32.mxu0 0.0
        %1315 = vmatmul.mubr.f32.gmra.mxu0 %v1191
        %v1316 = vpop.f32.mrf.mxu0
        %v1317 = vadd.f32 0.0, %v1316
        %v1318 = vpop.f32.mrf.mxu0
        %1319 = vmatprep.mubr.f32.mxu0 0.0
        %1320 = vmatmul.mubr.f32.gmra.mxu0 %v1194
        %v1321 = vpop.f32.mrf.mxu0
        %v1322 = vadd.f32 0.0, %v1321
        %v1323 = vpop.f32.mrf.mxu0
        %1324 = vmatprep.mubr.f32.mxu0 0.0
        %1325 = vmatmul.mubr.f32.gmra.mxu0 %v1197
        %v1326 = vpop.f32.mrf.mxu0
        %v1327 = vadd.f32 0.0, %v1326
        %v1328 = vpop.f32.mrf.mxu0
        %1329 = vmatprep.mubr.f32.mxu0 0.0
        %1330 = vmatmul.mubr.f32.gmra.mxu0 %v1200
        %v1331 = vpop.f32.mrf.mxu0
        %v1332 = vadd.f32 0.0, %v1331
        %v1333 = vpop.f32.mrf.mxu0
        %1334 = vmatprep.mubr.f32.mxu0 0.0
        %1335 = vmatmul.mubr.f32.gmra.mxu0 %v1203
        %v1336 = vpop.f32.mrf.mxu0
        %v1337 = vadd.f32 0.0, %v1336
        %v1338 = vpop.f32.mrf.mxu0
        %1339 = vmatprep.mubr.f32.mxu0 0.0
        %1340 = vmatmul.mubr.f32.gmra.mxu0 %v1206
        %v1341 = vpop.f32.mrf.mxu0
        %v1342 = vadd.f32 0.0, %v1341
        %v1343 = vpop.f32.mrf.mxu0
        %1344 = vmatprep.mubr.f32.mxu0 0.0
        %1345 = vmatmul.mubr.f32.gmra.mxu0 %v1209
        %v1346 = vpop.f32.mrf.mxu0
        %v1347 = vadd.f32 0.0, %v1346
        %v1348 = vpop.f32.mrf.mxu0
        %1349 = vmatprep.mubr.f32.mxu0 0.0
        %1350 = vmatmul.mubr.f32.gmra.mxu0 %v1212
        %v1351 = vpop.f32.mrf.mxu0
        %v1352 = vadd.f32 0.0, %v1351
        %v1353 = vpop.f32.mrf.mxu0
        %1354 = vmatprep.mubr.f32.mxu0 0.0
        %1355 = vmatmul.mubr.f32.gmra.mxu0 %v1215
        %v1356 = vpop.f32.mrf.mxu0
        %v1357 = vadd.f32 0.0, %v1356
        %v1358 = vpop.f32.mrf.mxu0
        %1359 = vmatprep.mubr.f32.mxu0 0.0
        %1360 = vmatmul.mubr.f32.gmra.mxu0 %v1218
        %v1361 = vpop.f32.mrf.mxu0
        %v1362 = vadd.f32 0.0, %v1361
        %v1363 = vpop.f32.mrf.mxu0
        %1364 = vdwg.mxu0
        %v1365 = vsel %vm683, %v1287, -1e+30
        %v1366 = vsel %vm683, %v1292, -1e+30
        %v1367 = vsel %vm683, %v1297, -1e+30
        %v1368 = vsel %vm683, %v1302, -1e+30
        %v1369 = vsel %vm683, %v1307, -1e+30
        %v1370 = vsel %vm683, %v1312, -1e+30
        %v1371 = vsel %vm683, %v1317, -1e+30
        %v1372 = vsel %vm683, %v1322, -1e+30
        %v1373 = vsel %vm683, %v1327, -1e+30
        %v1374 = vsel %vm683, %v1332, -1e+30
        %v1375 = vsel %vm683, %v1337, -1e+30
        %v1376 = vsel %vm683, %v1342, -1e+30
        %v1377 = vsel %vm683, %v1347, -1e+30
        %v1378 = vsel %vm683, %v1352, -1e+30
        %v1379 = vsel %vm683, %v1357, -1e+30
        %v1380 = vsel %vm683, %v1362, -1e+30
        %1381 = vmax.xlane.f32.xlu0 %v1365
        %v1382 = vpop.xlane.xlu0 %1381
        %1383 = vmax.xlane.f32.xlu0 %v1366
        %v1384 = vpop.xlane.xlu0 %1383
        %1385 = vmax.xlane.f32.xlu0 %v1367
        %v1386 = vpop.xlane.xlu0 %1385
        %1387 = vmax.xlane.f32.xlu0 %v1368
        %v1388 = vpop.xlane.xlu0 %1387
        %1389 = vmax.xlane.f32.xlu0 %v1369
        %v1390 = vpop.xlane.xlu0 %1389
        %1391 = vmax.xlane.f32.xlu0 %v1370
        %v1392 = vpop.xlane.xlu0 %1391
        %1393 = vmax.xlane.f32.xlu0 %v1371
        %v1394 = vpop.xlane.xlu0 %1393
        %1395 = vmax.xlane.f32.xlu0 %v1372
        %v1396 = vpop.xlane.xlu0 %1395
        %1397 = vmax.xlane.f32.xlu0 %v1373
        %v1398 = vpop.xlane.xlu0 %1397
        %1399 = vmax.xlane.f32.xlu0 %v1374
        %v1400 = vpop.xlane.xlu0 %1399
        %1401 = vmax.xlane.f32.xlu0 %v1375
        %v1402 = vpop.xlane.xlu0 %1401
        %1403 = vmax.xlane.f32.xlu0 %v1376
        %v1404 = vpop.xlane.xlu0 %1403
        %1405 = vmax.xlane.f32.xlu0 %v1377
        %v1406 = vpop.xlane.xlu0 %1405
        %1407 = vmax.xlane.f32.xlu0 %v1378
        %v1408 = vpop.xlane.xlu0 %1407
        %1409 = vmax.xlane.f32.xlu0 %v1379
        %v1410 = vpop.xlane.xlu0 %1409
        %1411 = vmax.xlane.f32.xlu0 %v1380
        %v1412 = vpop.xlane.xlu0 %1411
        %v1413 = vsub.f32 -inf, %v1382
        %v1414 = vsub.f32 -inf, %v1384
        %v1415 = vsub.f32 -inf, %v1386
        %v1416 = vsub.f32 -inf, %v1388
        %v1417 = vsub.f32 -inf, %v1390
        %v1418 = vsub.f32 -inf, %v1392
        %v1419 = vsub.f32 -inf, %v1394
        %v1420 = vsub.f32 -inf, %v1396
        %v1421 = vsub.f32 -inf, %v1398
        %v1422 = vsub.f32 -inf, %v1400
        %v1423 = vsub.f32 -inf, %v1402
        %v1424 = vsub.f32 -inf, %v1404
        %v1425 = vsub.f32 -inf, %v1406
        %v1426 = vsub.f32 -inf, %v1408
        %v1427 = vsub.f32 -inf, %v1410
        %v1428 = vsub.f32 -inf, %v1412
        %v1429 = vmul.f32 %v1413, 1.442695
        %v1430 = vpow.pop %v1429
        %v1431 = vmul.f32 %v1414, 1.442695
        %v1432 = vpow.pop %v1431
        %v1433 = vmul.f32 %v1415, 1.442695
        %v1434 = vpow.pop %v1433
        %v1435 = vmul.f32 %v1416, 1.442695
        %v1436 = vpow.pop %v1435
        %v1437 = vmul.f32 %v1417, 1.442695
        %v1438 = vpow.pop %v1437
        %v1439 = vmul.f32 %v1418, 1.442695
        %v1440 = vpow.pop %v1439
        %v1441 = vmul.f32 %v1419, 1.442695
        %v1442 = vpow.pop %v1441
        %v1443 = vmul.f32 %v1420, 1.442695
        %v1444 = vpow.pop %v1443
        %v1445 = vmul.f32 %v1421, 1.442695
        %v1446 = vpow.pop %v1445
        %v1447 = vmul.f32 %v1422, 1.442695
        %v1448 = vpow.pop %v1447
        %v1449 = vmul.f32 %v1423, 1.442695
        %v1450 = vpow.pop %v1449
        %v1451 = vmul.f32 %v1424, 1.442695
        %v1452 = vpow.pop %v1451
        %v1453 = vmul.f32 %v1425, 1.442695
        %v1454 = vpow.pop %v1453
        %v1455 = vmul.f32 %v1426, 1.442695
        %v1456 = vpow.pop %v1455
        %v1457 = vmul.f32 %v1427, 1.442695
        %v1458 = vpow.pop %v1457
        %v1459 = vmul.f32 %v1428, 1.442695
        %v1460 = vpow.pop %v1459
        %v1461 = vsub.f32 %v1365, %v1382
        %v1462 = vsub.f32 %v1366, %v1384
        %v1463 = vsub.f32 %v1367, %v1386
        %v1464 = vsub.f32 %v1368, %v1388
        %v1465 = vsub.f32 %v1369, %v1390
        %v1466 = vsub.f32 %v1370, %v1392
        %v1467 = vsub.f32 %v1371, %v1394
        %v1468 = vsub.f32 %v1372, %v1396
        %v1469 = vsub.f32 %v1373, %v1398
        %v1470 = vsub.f32 %v1374, %v1400
        %v1471 = vsub.f32 %v1375, %v1402
        %v1472 = vsub.f32 %v1376, %v1404
        %v1473 = vsub.f32 %v1377, %v1406
        %v1474 = vsub.f32 %v1378, %v1408
        %v1475 = vsub.f32 %v1379, %v1410
        %v1476 = vsub.f32 %v1380, %v1412
        %v1477 = vmul.f32 %v1461, 1.442695
        %v1478 = vpow.pop %v1477
        %v1479 = vmul.f32 %v1462, 1.442695
        %v1480 = vpow.pop %v1479
        %v1481 = vmul.f32 %v1463, 1.442695
        %v1482 = vpow.pop %v1481
        %v1483 = vmul.f32 %v1464, 1.442695
        %v1484 = vpow.pop %v1483
        %v1485 = vmul.f32 %v1465, 1.442695
        %v1486 = vpow.pop %v1485
        %v1487 = vmul.f32 %v1466, 1.442695
        %v1488 = vpow.pop %v1487
        %v1489 = vmul.f32 %v1467, 1.442695
        %v1490 = vpow.pop %v1489
        %v1491 = vmul.f32 %v1468, 1.442695
        %v1492 = vpow.pop %v1491
        %v1493 = vmul.f32 %v1469, 1.442695
        %v1494 = vpow.pop %v1493
        %v1495 = vmul.f32 %v1470, 1.442695
        %v1496 = vpow.pop %v1495
        %v1497 = vmul.f32 %v1471, 1.442695
        %v1498 = vpow.pop %v1497
        %v1499 = vmul.f32 %v1472, 1.442695
        %v1500 = vpow.pop %v1499
        %v1501 = vmul.f32 %v1473, 1.442695
        %v1502 = vpow.pop %v1501
        %v1503 = vmul.f32 %v1474, 1.442695
        %v1504 = vpow.pop %v1503
        %v1505 = vmul.f32 %v1475, 1.442695
        %v1506 = vpow.pop %v1505
        %v1507 = vmul.f32 %v1476, 1.442695
        %v1508 = vpow.pop %v1507
        %v1509 = vmul.f32 %v1430, 0.0
        %v1510 = vmul.f32 %v1432, 0.0
        %v1511 = vmul.f32 %v1434, 0.0
        %v1512 = vmul.f32 %v1436, 0.0
        %v1513 = vmul.f32 %v1438, 0.0
        %v1514 = vmul.f32 %v1440, 0.0
        %v1515 = vmul.f32 %v1442, 0.0
        %v1516 = vmul.f32 %v1444, 0.0
        %v1517 = vmul.f32 %v1446, 0.0
        %v1518 = vmul.f32 %v1448, 0.0
        %v1519 = vmul.f32 %v1450, 0.0
        %v1520 = vmul.f32 %v1452, 0.0
        %v1521 = vmul.f32 %v1454, 0.0
        %v1522 = vmul.f32 %v1456, 0.0
        %v1523 = vmul.f32 %v1458, 0.0
        %v1524 = vmul.f32 %v1460, 0.0
        %1525 = vadd.xlane.f32.xlu0 %v1478
        %v1526 = vpop.xlane.xlu0 %1525
        %1527 = vadd.xlane.f32.xlu0 %v1480
        %v1528 = vpop.xlane.xlu0 %1527
        %1529 = vadd.xlane.f32.xlu0 %v1482
        %v1530 = vpop.xlane.xlu0 %1529
        %1531 = vadd.xlane.f32.xlu0 %v1484
        %v1532 = vpop.xlane.xlu0 %1531
        %1533 = vadd.xlane.f32.xlu0 %v1486
        %v1534 = vpop.xlane.xlu0 %1533
        %1535 = vadd.xlane.f32.xlu0 %v1488
        %v1536 = vpop.xlane.xlu0 %1535
        %1537 = vadd.xlane.f32.xlu0 %v1490
        %v1538 = vpop.xlane.xlu0 %1537
        %1539 = vadd.xlane.f32.xlu0 %v1492
        %v1540 = vpop.xlane.xlu0 %1539
        %1541 = vadd.xlane.f32.xlu0 %v1494
        %v1542 = vpop.xlane.xlu0 %1541
        %1543 = vadd.xlane.f32.xlu0 %v1496
        %v1544 = vpop.xlane.xlu0 %1543
        %1545 = vadd.xlane.f32.xlu0 %v1498
        %v1546 = vpop.xlane.xlu0 %1545
        %1547 = vadd.xlane.f32.xlu0 %v1500
        %v1548 = vpop.xlane.xlu0 %1547
        %1549 = vadd.xlane.f32.xlu0 %v1502
        %v1550 = vpop.xlane.xlu0 %1549
        %1551 = vadd.xlane.f32.xlu0 %v1504
        %v1552 = vpop.xlane.xlu0 %1551
        %1553 = vadd.xlane.f32.xlu0 %v1506
        %v1554 = vpop.xlane.xlu0 %1553
        %1555 = vadd.xlane.f32.xlu0 %v1508
        %v1556 = vpop.xlane.xlu0 %1555
        %v1557 = vadd.f32 %v1509, %v1526
        %v1558 = vadd.f32 %v1510, %v1528
        %v1559 = vadd.f32 %v1511, %v1530
        %v1560 = vadd.f32 %v1512, %v1532
        %v1561 = vadd.f32 %v1513, %v1534
        %v1562 = vadd.f32 %v1514, %v1536
        %v1563 = vadd.f32 %v1515, %v1538
        %v1564 = vadd.f32 %v1516, %v1540
        %v1565 = vadd.f32 %v1517, %v1542
        %v1566 = vadd.f32 %v1518, %v1544
        %v1567 = vadd.f32 %v1519, %v1546
        %v1568 = vadd.f32 %v1520, %v1548
        %v1569 = vadd.f32 %v1521, %v1550
        %v1570 = vadd.f32 %v1522, %v1552
        %v1571 = vadd.f32 %v1523, %v1554
        %v1572 = vadd.f32 %v1524, %v1556
        %1573 = vmatprep.subr.mxu0 0.0
        %1574 = vmatpush1.xpose.msra.mxu0 0.0
        %1575 = vmatprep.subr.mxu0 0.0
        %1576 = vmatpush1.xpose.msra.mxu0 0.0
        %1577 = vmatprep.subr.mxu0 0.0
        %1578 = vmatpush1.xpose.msra.mxu0 0.0
        %1579 = vmatprep.subr.mxu0 0.0
        %1580 = vmatpush1.xpose.msra.mxu0 0.0
        %1581 = vmatprep.subr.mxu0 0.0
        %1582 = vmatpush1.xpose.msra.mxu0 0.0
        %1583 = vmatprep.subr.mxu0 0.0
        %1584 = vmatpush1.xpose.msra.mxu0 0.0
        %1585 = vmatprep.subr.mxu0 0.0
        %1586 = vmatpush1.xpose.msra.mxu0 0.0
        %1587 = vmatprep.subr.mxu0 0.0
        %1588 = vmatpush1.xpose.msra.mxu0 0.0
        %1589 = vmatprep.subr.mxu0 0.0
        %1590 = vmatpush1.xpose.msra.mxu0 0.0
        %1591 = vmatprep.subr.mxu0 0.0
        %1592 = vmatpush1.xpose.msra.mxu0 0.0
        %1593 = vmatprep.subr.mxu0 0.0
        %1594 = vmatpush1.xpose.msra.mxu0 0.0
        %1595 = vmatprep.subr.mxu0 0.0
        %1596 = vmatpush1.xpose.msra.mxu0 0.0
        %1597 = vmatprep.subr.mxu0 0.0
        %1598 = vmatpush1.xpose.msra.mxu0 %v1171
        %1599 = vmatprep.subr.mxu0 0.0
        %1600 = vmatpush1.xpose.msra.mxu0 %v1170
        %1601 = vmatprep.subr.mxu0 0.0
        %1602 = vmatpush1.xpose.msra.mxu0 %v1169
        %1603 = vmatprep.subr.mxu0 0.0
        %1604 = vmatpush1.xpose.msra.mxu0 %v1168
        %1605 = vmatprep.subr.mxu0 0.0
        %1606 = vmatpush2.xpose.msra.mxu0 0.0
        %1607 = vmatprep.subr.mxu0 0.0
        %1608 = vmatpush2.xpose.msra.mxu0 0.0
        %1609 = vmatprep.subr.mxu0 0.0
        %1610 = vmatpush2.xpose.msra.mxu0 0.0
        %1611 = vmatprep.subr.mxu0 0.0
        %1612 = vmatpush2.xpose.msra.mxu0 0.0
        %1613 = vmatprep.subr.mxu0 0.0
        %1614 = vmatpush2.xpose.msra.mxu0 0.0
        %1615 = vmatprep.subr.mxu0 0.0
        %1616 = vmatpush2.xpose.msra.mxu0 0.0
        %1617 = vmatprep.subr.mxu0 0.0
        %1618 = vmatpush2.xpose.msra.mxu0 0.0
        %1619 = vmatprep.subr.mxu0 0.0
        %1620 = vmatpush2.xpose.msra.mxu0 0.0
        %1621 = vmatprep.subr.mxu0 0.0
        %1622 = vmatpush2.xpose.msra.mxu0 0.0
        %1623 = vmatprep.subr.mxu0 0.0
        %1624 = vmatpush2.xpose.msra.mxu0 0.0
        %1625 = vmatprep.subr.mxu0 0.0
        %1626 = vmatpush2.xpose.msra.mxu0 0.0
        %1627 = vmatprep.subr.mxu0 0.0
        %1628 = vmatpush2.xpose.msra.mxu0 0.0
        %1629 = vmatprep.subr.mxu0 0.0
        %1630 = vmatpush2.xpose.msra.mxu0 0.0
        %1631 = vmatprep.subr.mxu0 0.0
        %1632 = vmatpush2.xpose.msra.mxu0 0.0
        %1633 = vmatprep.subr.mxu0 0.0
        %1634 = vmatpush2.xpose.msra.mxu0 0.0
        %1635 = vmatprep.subr.mxu0 0.0
        %1636 = vmatpush2.xpose.msra.mxu0 0.0
        %1637 = vmatprep.mubr.f32.mxu0 0.0
        %1638 = vmatmul.mubr.f32.gmra.mxu0 %v1478
        %v1639 = vpop.f32.mrf.mxu0
        %v1640 = vadd.f32 0.0, %v1639
        %v1641 = vpop.f32.mrf.mxu0
        %1642 = vmatprep.mubr.f32.mxu0 0.0
        %1643 = vmatmul.mubr.f32.gmra.mxu0 %v1480
        %v1644 = vpop.f32.mrf.mxu0
        %v1645 = vadd.f32 0.0, %v1644
        %v1646 = vpop.f32.mrf.mxu0
        %1647 = vmatprep.mubr.f32.mxu0 0.0
        %1648 = vmatmul.mubr.f32.gmra.mxu0 %v1482
        %v1649 = vpop.f32.mrf.mxu0
        %v1650 = vadd.f32 0.0, %v1649
        %v1651 = vpop.f32.mrf.mxu0
        %1652 = vmatprep.mubr.f32.mxu0 0.0
        %1653 = vmatmul.mubr.f32.gmra.mxu0 %v1484
        %v1654 = vpop.f32.mrf.mxu0
        %v1655 = vadd.f32 0.0, %v1654
        %v1656 = vpop.f32.mrf.mxu0
        %1657 = vmatprep.mubr.f32.mxu0 0.0
        %1658 = vmatmul.mubr.f32.gmra.mxu0 %v1486
        %v1659 = vpop.f32.mrf.mxu0
        %v1660 = vadd.f32 0.0, %v1659
        %v1661 = vpop.f32.mrf.mxu0
        %1662 = vmatprep.mubr.f32.mxu0 0.0
        %1663 = vmatmul.mubr.f32.gmra.mxu0 %v1488
        %v1664 = vpop.f32.mrf.mxu0
        %v1665 = vadd.f32 0.0, %v1664
        %v1666 = vpop.f32.mrf.mxu0
        %1667 = vmatprep.mubr.f32.mxu0 0.0
        %1668 = vmatmul.mubr.f32.gmra.mxu0 %v1490
        %v1669 = vpop.f32.mrf.mxu0
        %v1670 = vadd.f32 0.0, %v1669
        %v1671 = vpop.f32.mrf.mxu0
        %1672 = vmatprep.mubr.f32.mxu0 0.0
        %1673 = vmatmul.mubr.f32.gmra.mxu0 %v1492
        %v1674 = vpop.f32.mrf.mxu0
        %v1675 = vadd.f32 0.0, %v1674
        %v1676 = vpop.f32.mrf.mxu0
        %1677 = vmatprep.mubr.f32.mxu0 0.0
        %1678 = vmatmul.mubr.f32.gmra.mxu0 %v1494
        %v1679 = vpop.f32.mrf.mxu0
        %v1680 = vadd.f32 0.0, %v1679
        %v1681 = vpop.f32.mrf.mxu0
        %1682 = vmatprep.mubr.f32.mxu0 0.0
        %1683 = vmatmul.mubr.f32.gmra.mxu0 %v1496
        %v1684 = vpop.f32.mrf.mxu0
        %v1685 = vadd.f32 0.0, %v1684
        %v1686 = vpop.f32.mrf.mxu0
        %1687 = vmatprep.mubr.f32.mxu0 0.0
        %1688 = vmatmul.mubr.f32.gmra.mxu0 %v1498
        %v1689 = vpop.f32.mrf.mxu0
        %v1690 = vadd.f32 0.0, %v1689
        %v1691 = vpop.f32.mrf.mxu0
        %1692 = vmatprep.mubr.f32.mxu0 0.0
        %1693 = vmatmul.mubr.f32.gmra.mxu0 %v1500
        %v1694 = vpop.f32.mrf.mxu0
        %v1695 = vadd.f32 0.0, %v1694
        %v1696 = vpop.f32.mrf.mxu0
        %1697 = vmatprep.mubr.f32.mxu0 0.0
        %1698 = vmatmul.mubr.f32.gmra.mxu0 %v1502
        %v1699 = vpop.f32.mrf.mxu0
        %v1700 = vadd.f32 0.0, %v1699
        %v1701 = vpop.f32.mrf.mxu0
        %1702 = vmatprep.mubr.f32.mxu0 0.0
        %1703 = vmatmul.mubr.f32.gmra.mxu0 %v1504
        %v1704 = vpop.f32.mrf.mxu0
        %v1705 = vadd.f32 0.0, %v1704
        %v1706 = vpop.f32.mrf.mxu0
        %1707 = vmatprep.mubr.f32.mxu0 0.0
        %1708 = vmatmul.mubr.f32.gmra.mxu0 %v1506
        %v1709 = vpop.f32.mrf.mxu0
        %v1710 = vadd.f32 0.0, %v1709
        %v1711 = vpop.f32.mrf.mxu0
        %1712 = vmatprep.mubr.f32.mxu0 0.0
        %1713 = vmatmul.mubr.f32.gmra.mxu0 %v1508
        %v1714 = vpop.f32.mrf.mxu0
        %v1715 = vadd.f32 0.0, %v1714
        %v1716 = vpop.f32.mrf.mxu0
        %1717 = vdwg.mxu0
        %v1718 = vadd.f32 %v1509, %v1640
        %v1719 = vadd.f32 %v1510, %v1645
        %v1720 = vadd.f32 %v1511, %v1650
        %v1721 = vadd.f32 %v1512, %v1655
        %v1722 = vadd.f32 %v1513, %v1660
        %v1723 = vadd.f32 %v1514, %v1665
        %v1724 = vadd.f32 %v1515, %v1670
        %v1725 = vadd.f32 %v1516, %v1675
        %v1726 = vadd.f32 %v1517, %v1680
        %v1727 = vadd.f32 %v1518, %v1685
        %v1728 = vadd.f32 %v1519, %v1690
        %v1729 = vadd.f32 %v1520, %v1695
        %v1730 = vadd.f32 %v1521, %v1700
        %v1731 = vadd.f32 %v1522, %v1705
        %v1732 = vadd.f32 %v1523, %v1710
        %v1733 = vadd.f32 %v1524, %v1715
        %v1734 = vrcp.pop %v1557
        %v1735 = vrcp.pop %v1558
        %v1736 = vrcp.pop %v1559
        %v1737 = vrcp.pop %v1560
        %v1738 = vrcp.pop %v1561
        %v1739 = vrcp.pop %v1562
        %v1740 = vrcp.pop %v1563
        %v1741 = vrcp.pop %v1564
        %v1742 = vrcp.pop %v1565
        %v1743 = vrcp.pop %v1566
        %v1744 = vrcp.pop %v1567
        %v1745 = vrcp.pop %v1568
        %v1746 = vrcp.pop %v1569
        %v1747 = vrcp.pop %v1570
        %v1748 = vrcp.pop %v1571
        %v1749 = vrcp.pop %v1572
        %v1750 = vmul.f32 %v1718, %v1734
        %v1751 = vmul.f32 %v1719, %v1735
        %v1752 = vmul.f32 %v1720, %v1736
        %v1753 = vmul.f32 %v1721, %v1737
        %v1754 = vmul.f32 %v1722, %v1738
        %v1755 = vmul.f32 %v1723, %v1739
        %v1756 = vmul.f32 %v1724, %v1740
        %v1757 = vmul.f32 %v1725, %v1741
        %v1758 = vmul.f32 %v1726, %v1742
        %v1759 = vmul.f32 %v1727, %v1743
        %v1760 = vmul.f32 %v1728, %v1744
        %v1761 = vmul.f32 %v1729, %v1745
        %v1762 = vmul.f32 %v1730, %v1746
        %v1763 = vmul.f32 %v1731, %v1747
        %v1764 = vmul.f32 %v1732, %v1748
        %v1765 = vmul.f32 %v1733, %v1749
        %1766 = vxpose.xlu0.b32.start [1/16] %v1750, 128
        %1767 = vxpose.xlu0.b32.cont [2/16] %v1751, 128
        %1768 = vxpose.xlu0.b32.cont [3/16] %v1752, 128
        %1769 = vxpose.xlu0.b32.cont [4/16] %v1753, 128
        %1770 = vxpose.xlu0.b32.cont [5/16] %v1754, 128
        %1771 = vxpose.xlu0.b32.cont [6/16] %v1755, 128
        %1772 = vxpose.xlu0.b32.cont [7/16] %v1756, 128
        %1773 = vxpose.xlu0.b32.cont [8/16] %v1757, 128
        %1774 = vxpose.xlu0.b32.cont [9/16] %v1758, 128
        %1775 = vxpose.xlu0.b32.cont [10/16] %v1759, 128
        %1776 = vxpose.xlu0.b32.cont [11/16] %v1760, 128
        %1777 = vxpose.xlu0.b32.cont [12/16] %v1761, 128
        %1778 = vxpose.xlu0.b32.cont [13/16] %v1762, 128
        %1779 = vxpose.xlu0.b32.cont [14/16] %v1763, 128
        %1780 = vxpose.xlu0.b32.cont [15/16] %v1764, 128
        %1781 = vxpose.xlu0.b32.end [16/16] %v1765, 128
        %v1782 = vpop.trf.xlu0
        %v1783 = vpop.trf.xlu0
        %v1784 = vpop.trf.xlu0
        %v1785 = vpop.trf.xlu0
        %v1786 = vpop.trf.xlu0
        %v1787 = vpop.trf.xlu0
        %v1788 = vpop.trf.xlu0
        %v1789 = vpop.trf.xlu0
        %v1790 = vpop.trf.xlu0
        %v1791 = vpop.trf.xlu0
        %v1792 = vpop.trf.xlu0
        %v1793 = vpop.trf.xlu0
        %v1794 = vpop.trf.xlu0
        %v1795 = vpop.trf.xlu0
        %v1796 = vpop.trf.xlu0
        %v1797 = vpop.trf.xlu0
        %s1798 = scalar_lea.vmem %s435, 32
        %1799 = vst [vmem:[%s1798] sm:$0xff] %v1782
        %1800 = vst [vmem:[%s1798 + $0x8] sm:$0xff] %v1783
        %1801 = vst [vmem:[%s1798 + $0x10] sm:$0xff] %v1784
        %1802 = vst [vmem:[%s1798 + $0x18] sm:$0xff] %v1785
        %s1803 = smul.u32 2, %s18
        %p1804 = scmp.lt.s32.totalorder %s1803, 3
        %s1805 = scalar_select %p1804, %s1803, 3
        %p1806 = scmp.lt.s32.totalorder %s19, 0
        %s1807 = scalar_select %p1806, %s19, 0
        %s1808 = smul.addr %s1805, 4
        %s1809 = sadd.s32 %s1807, %s1808
        %s1810 = smul.addr %s1809, 8
        %s1811 = scalar_lea.vmem %s3, %s1810
        // Predicated region
        $region147: #{qkv_attention_legacy.1} parent=133 // pred_check
          %p1812 = pneg %p126
        $region148: #{qkv_attention_legacy.1} parent=133 // pred_check_branch
          %1814 = sbr.rel (%p1812) target = $region150
        $region149: #{qkv_attention_legacy.1} parent=133 // pred_region
          %s1815 = smul.u32 2, %s18
        $region150: #{qkv_attention_legacy.1} parent=133 // pred_fallthru
          _
      $region134: #{qkv_attention_legacy.1} parent=5 // pred_fallthru
        _
      %p1816 = scmp.le.s32.totalorder 2, %s9
      // Predicated region
      $region151: #{qkv_attention_legacy.1} parent=5 // pred_check
        %p1817 = pneg %p1816
      $region152: #{qkv_attention_legacy.1} parent=5 // pred_check_branch
        %1819 = sbr.rel (%p1817) target = $region154
      $region153: #{qkv_attention_legacy.1} parent=5 // pred_region
        %s1820 = ssub.s32 %s9, 2
        // Predicated region
        $region155: #{qkv_attention_legacy.1} parent=153 // pred_check
          %p1821 = pneg %p132
        $region156: #{qkv_attention_legacy.1} parent=153 // pred_check_branch
          %1823 = sbr.rel (%p1821) target = $region158
        $region157: #{qkv_attention_legacy.1} parent=153 // pred_region
          %s1824 = smul.u32 2, %s20
          %p1825 = scmp.lt.s32.totalorder %s1824, 3
          %s1826 = scalar_select %p1825, %s1824, 3
          %p1827 = scmp.lt.s32.totalorder %s21, 0
          %s1828 = scalar_select %p1827, %s21, 0
          %s1829 = smul.addr %s1826, 4
          %s1830 = sadd.s32 %s1828, %s1829
          %s1831 = smul.addr %s1830, 8
          %s1832 = scalar_lea.vmem %s3, %s1831
        $region158: #{qkv_attention_legacy.1} parent=153 // pred_fallthru
          _
      $region154: #{qkv_attention_legacy.1} parent=5 // pred_fallthru
        _
    $region6: #{qkv_attention_legacy.1} parent=1 // loop_footer
      %s13 = sadd.s32 1, %s9
    $region7: #{qkv_attention_legacy.1} parent=1 // loop_footer_branch
      %8 = sbr.rel target = $region3
    $region8: #{qkv_attention_legacy.1} parent=1 // loop_exit
      _

</llo_original>
